<compile_context>
chip_gen: v6e
topology: v6e:2x2x1
jax: 0.10.0
libtpu: 0.0.40
codegen_flags: <defaults>
</compile_context>

<pallas_src>
import jax
import jax.numpy as jnp
from jax import lax
from jax.experimental import pallas as pl
from jax.experimental.pallas import tpu as pltpu

N_HEAD = 2
D_EMBED = 16
SEQ = 16


def _mha_kernel(q_ref, k_ref, v_ref, w_ref, b_ref, o_ref):
    # Per-batch tile: q/k/v/o refs are (1, S, D); w_ref is (3, D, D); b_ref is (3, 1, D).
    q_in = q_ref[0]
    k_in = k_ref[0]
    v_in = v_ref[0]

    # The 1/sqrt(n_head) attention scale is pre-folded into w_ref[0] / b_ref[0].
    q = jnp.dot(q_in, w_ref[0], preferred_element_type=jnp.float32,
                precision=lax.Precision.HIGHEST) + b_ref[0]
    k = jnp.dot(k_in, w_ref[1], preferred_element_type=jnp.float32,
                precision=lax.Precision.HIGHEST) + b_ref[1]
    v = jnp.dot(v_in, w_ref[2], preferred_element_type=jnp.float32,
                precision=lax.Precision.HIGHEST) + b_ref[2]

    # scores = q @ k^T without materializing a transpose of k.
    scores = lax.dot_general(
        q, k, dimension_numbers=(((1,), (1,)), ((), ())),
        preferred_element_type=jnp.float32,
        precision=lax.Precision.HIGHEST)                      # (S, S)

    # Numerically-stable exact softmax (nothing saturates at S=16, so exact
    # division is free accuracy vs the approx-reciprocal variant).
    m = jnp.max(scores, axis=-1, keepdims=True)
    p = jnp.exp(scores - m)
    p = p / jnp.sum(p, axis=-1, keepdims=True)

    # dropout_p == 0.0 -> identity.
    # NOTE: n = n_proj((q+k+v)/n_head) in the PyTorch forward is dead code (its
    # result is never used), so it is intentionally not computed here.
    o_ref[0] = jnp.dot(p, v, preferred_element_type=jnp.float32,
                       precision=lax.Precision.HIGHEST).astype(o_ref.dtype)


def mha_forward(query, key, value, packed_params):
    """query/key/value: (B, S, D) float32.  Returns (B, S, D) float32."""
    B, S, D = query.shape
    assert key.shape == (B, S, D) and value.shape == (B, S, D)
    w_stacked, b_stacked = packed_params  # (3, D, D), (3, 1, D)

    return pl.pallas_call(
        _mha_kernel,
        out_shape=jax.ShapeDtypeStruct((B, S, D), jnp.float32),
        grid=(B,),
        in_specs=[
            pl.BlockSpec((1, S, D), lambda b: (b, 0, 0)),   # query
            pl.BlockSpec((1, S, D), lambda b: (b, 0, 0)),   # key
            pl.BlockSpec((1, S, D), lambda b: (b, 0, 0)),   # value
            pl.BlockSpec((3, D, D), lambda b: (0, 0, 0)),   # stacked weights (resident)
            pl.BlockSpec((3, 1, D), lambda b: (0, 0, 0)),   # stacked biases  (resident)
        ],
        out_specs=pl.BlockSpec((1, S, D), lambda b: (b, 0, 0)),
        compiler_params=pltpu.CompilerParams(
            dimension_semantics=("parallel",)),
    )(query, key, value, w_stacked, b_stacked)


def init_params(rng):
    """Deterministic init for the q/k/v projection Linear layers (d_embed -> d_embed).

    Weights are stored transposed vs PyTorch, i.e. (in, out), so y = x @ W + b.
    """
    keys = jax.random.split(rng, 6)
    bound = 1.0 / jnp.sqrt(jnp.float32(D_EMBED))  # PyTorch Linear default bound

    def w(k):
        return jax.random.uniform(k, (D_EMBED, D_EMBED), jnp.float32, -bound, bound)

    def b(k):
        return jax.random.uniform(k, (1, D_EMBED), jnp.float32, -bound, bound)

    wq, bq = w(keys[0]), b(keys[1])
    wk, bk = w(keys[2]), b(keys[3])
    wv, bv = w(keys[4]), b(keys[5])
    return (wq, bq, wk, bk, wv, bv)


def pack_params(params):
    """One-time transform: stack the three dense weights / biases, with the
    attention scale n_head**-0.5 folded into the q projection."""
    wq, bq, wk, bk, wv, bv = params
    scale = jnp.float32(N_HEAD) ** -0.5

    w_stacked = jnp.stack([wq * scale, wk, wv], axis=0)            # (3, D, D)
    b_stacked = jnp.stack([bq * scale, bk, bv], axis=0)            # (3, 1, D)
    return (w_stacked, b_stacked)


def reference_forward(query, key, value, params):
    """Pure-JAX reference mirroring the PyTorch forward exactly (unpacked params)."""
    wq, bq, wk, bk, wv, bv = params
    q = query @ wq + bq
    k = key @ wk + bk
    v = value @ wv + bv
    # n = n_proj((q+k+v)/n_head) is never used in the PyTorch forward -> omitted.
    qk = jnp.einsum("bqd,bkd->bqk", q, k) * (N_HEAD ** -0.5)
    p = jax.nn.softmax(qk, axis=-1)
    return jnp.einsum("bqk,bkd->bqd", p, v)


if __name__ == "__main__":
    root = jax.random.PRNGKey(0)
    k_param, k_q, k_k, k_v = jax.random.split(root, 4)

    raw_params = init_params(k_param)
    packed_params = pack_params(raw_params)

    query = jax.random.normal(k_q, (1, SEQ, D_EMBED), jnp.float32)
    key = jax.random.normal(k_k, (1, SEQ, D_EMBED), jnp.float32)
    value = jax.random.normal(k_v, (1, SEQ, D_EMBED), jnp.float32)

    out = mha_forward(query, key, value, packed_params)
    out = jax.block_until_ready(out)

    ref = reference_forward(query, key, value, raw_params)
    assert out.shape == (1, SEQ, D_EMBED)
    assert jnp.allclose(out, ref, atol=1e-5, rtol=1e-5), "mismatch vs pure-JAX reference"

    print("KERNEL_OK")
</pallas_src>

<mosaic_0001>
module attributes {stable_mosaic.version = 11 : i64} {
  func.func @_mha_kernel(%arg0: i32, %arg1: memref<1x16x16xf32, #tpu.memory_space<vmem>>, %arg2: memref<1x16x16xf32, #tpu.memory_space<vmem>>, %arg3: memref<1x16x16xf32, #tpu.memory_space<vmem>>, %arg4: memref<3x16x16xf32, #tpu.memory_space<vmem>>, %arg5: memref<3x1x16xf32, #tpu.memory_space<vmem>>, %arg6: memref<1x16x16xf32, #tpu.memory_space<vmem>>) attributes {dimension_semantics = [#tpu.dimension_semantics<parallel>], iteration_bounds = array<i64: 1>, scalar_prefetch = 0 : i64, scratch_operands = 0 : i64, tpu.core_type = #tpu.core_type<tc>, window_params = [{transform_indices = @transform_0, window_bounds = array<i64: 1, 16, 16>}, {transform_indices = @transform_1, window_bounds = array<i64: 1, 16, 16>}, {transform_indices = @transform_2, window_bounds = array<i64: 1, 16, 16>}, {pipeline_mode = #tpu.pipeline_mode<synchronous>, transform_indices = @transform_3, window_bounds = array<i64: 3, 16, 16>}, {pipeline_mode = #tpu.pipeline_mode<synchronous>, transform_indices = @transform_4, window_bounds = array<i64: 3, 1, 16>}, {transform_indices = @transform_5, window_bounds = array<i64: 1, 16, 16>}]} {
    %c0 = arith.constant 0 : index
    %c0_0 = arith.constant 0 : index
    %c0_1 = arith.constant 0 : index
    %0 = vector.load %arg1[%c0, %c0_0, %c0_1] : memref<1x16x16xf32, #tpu.memory_space<vmem>>, vector<1x16x16xf32>
    %1 = vector.shape_cast %0 : vector<1x16x16xf32> to vector<16x16xf32>
    %c0_2 = arith.constant 0 : index
    %c0_3 = arith.constant 0 : index
    %c0_4 = arith.constant 0 : index
    %2 = vector.load %arg2[%c0_2, %c0_3, %c0_4] : memref<1x16x16xf32, #tpu.memory_space<vmem>>, vector<1x16x16xf32>
    %3 = vector.shape_cast %2 : vector<1x16x16xf32> to vector<16x16xf32>
    %c0_5 = arith.constant 0 : index
    %c0_6 = arith.constant 0 : index
    %c0_7 = arith.constant 0 : index
    %4 = vector.load %arg3[%c0_5, %c0_6, %c0_7] : memref<1x16x16xf32, #tpu.memory_space<vmem>>, vector<1x16x16xf32>
    %5 = vector.shape_cast %4 : vector<1x16x16xf32> to vector<16x16xf32>
    %c0_8 = arith.constant 0 : index
    %c0_9 = arith.constant 0 : index
    %c0_10 = arith.constant 0 : index
    %6 = vector.load %arg4[%c0_8, %c0_9, %c0_10] : memref<3x16x16xf32, #tpu.memory_space<vmem>>, vector<1x16x16xf32>
    %7 = vector.shape_cast %6 : vector<1x16x16xf32> to vector<16x16xf32>
    %cst = arith.constant dense<0.000000e+00> : vector<16x16xf32>
    %8 = tpu.matmul %1, %7, %cst {dimension_numbers = #tpu.dot_dimension_numbers<[1], [0], [0], [1], [0, 0, 1, 1], [], []>, precision = #tpu.contract_precision<fp32>} : vector<16x16xf32>, vector<16x16xf32>, vector<16x16xf32> -> vector<16x16xf32>
    %c0_11 = arith.constant 0 : index
    %c0_12 = arith.constant 0 : index
    %c0_13 = arith.constant 0 : index
    %9 = vector.load %arg5[%c0_11, %c0_12, %c0_13] : memref<3x1x16xf32, #tpu.memory_space<vmem>>, vector<1x1x16xf32>
    %10 = vector.shape_cast %9 : vector<1x1x16xf32> to vector<1x16xf32>
    %11 = vector.broadcast %10 : vector<1x16xf32> to vector<16x16xf32>
    %12 = arith.addf %8, %11 : vector<16x16xf32>
    %c1 = arith.constant 1 : index
    %c0_14 = arith.constant 0 : index
    %c0_15 = arith.constant 0 : index
    %13 = vector.load %arg4[%c1, %c0_14, %c0_15] : memref<3x16x16xf32, #tpu.memory_space<vmem>>, vector<1x16x16xf32>
    %14 = vector.shape_cast %13 : vector<1x16x16xf32> to vector<16x16xf32>
    %cst_16 = arith.constant dense<0.000000e+00> : vector<16x16xf32>
    %15 = tpu.matmul %3, %14, %cst_16 {dimension_numbers = #tpu.dot_dimension_numbers<[1], [0], [0], [1], [0, 0, 1, 1], [], []>, precision = #tpu.contract_precision<fp32>} : vector<16x16xf32>, vector<16x16xf32>, vector<16x16xf32> -> vector<16x16xf32>
    %c1_17 = arith.constant 1 : index
    %c0_18 = arith.constant 0 : index
    %c0_19 = arith.constant 0 : index
    %16 = vector.load %arg5[%c1_17, %c0_18, %c0_19] : memref<3x1x16xf32, #tpu.memory_space<vmem>>, vector<1x1x16xf32>
    %17 = vector.shape_cast %16 : vector<1x1x16xf32> to vector<1x16xf32>
    %18 = vector.broadcast %17 : vector<1x16xf32> to vector<16x16xf32>
    %19 = arith.addf %15, %18 : vector<16x16xf32>
    %c2 = arith.constant 2 : index
    %c0_20 = arith.constant 0 : index
    %c0_21 = arith.constant 0 : index
    %20 = vector.load %arg4[%c2, %c0_20, %c0_21] : memref<3x16x16xf32, #tpu.memory_space<vmem>>, vector<1x16x16xf32>
    %21 = vector.shape_cast %20 : vector<1x16x16xf32> to vector<16x16xf32>
    %cst_22 = arith.constant dense<0.000000e+00> : vector<16x16xf32>
    %22 = tpu.matmul %5, %21, %cst_22 {dimension_numbers = #tpu.dot_dimension_numbers<[1], [0], [0], [1], [0, 0, 1, 1], [], []>, precision = #tpu.contract_precision<fp32>} : vector<16x16xf32>, vector<16x16xf32>, vector<16x16xf32> -> vector<16x16xf32>
    %c2_23 = arith.constant 2 : index
    %c0_24 = arith.constant 0 : index
    %c0_25 = arith.constant 0 : index
    %23 = vector.load %arg5[%c2_23, %c0_24, %c0_25] : memref<3x1x16xf32, #tpu.memory_space<vmem>>, vector<1x1x16xf32>
    %24 = vector.shape_cast %23 : vector<1x1x16xf32> to vector<1x16xf32>
    %25 = vector.broadcast %24 : vector<1x16xf32> to vector<16x16xf32>
    %26 = arith.addf %22, %25 : vector<16x16xf32>
    %cst_26 = arith.constant dense<0.000000e+00> : vector<16x16xf32>
    %27 = tpu.matmul %12, %19, %cst_26 {dimension_numbers = #tpu.dot_dimension_numbers<[1], [1], [0], [0], [0, 0, 1, 0], [], []>, precision = #tpu.contract_precision<fp32>} : vector<16x16xf32>, vector<16x16xf32>, vector<16x16xf32> -> vector<16x16xf32>
    %cst_27 = arith.constant dense<0xFF800000> : vector<16xf32>
    %28 = vector.multi_reduction <maximumf>, %27, %cst_27 [1] : vector<16x16xf32> to vector<16xf32>
    %29 = vector.shape_cast %28 : vector<16xf32> to vector<16x1xf32>
    %30 = vector.broadcast %29 : vector<16x1xf32> to vector<16x16xf32>
    %31 = arith.subf %27, %30 : vector<16x16xf32>
    %32 = math.exp %31 : vector<16x16xf32>
    %cst_28 = arith.constant dense<0.000000e+00> : vector<16xf32>
    %33 = vector.multi_reduction <add>, %32, %cst_28 [1] : vector<16x16xf32> to vector<16xf32>
    %34 = vector.shape_cast %33 : vector<16xf32> to vector<16x1xf32>
    %35 = vector.broadcast %34 : vector<16x1xf32> to vector<16x16xf32>
    %36 = arith.divf %32, %35 : vector<16x16xf32>
    %cst_29 = arith.constant dense<0.000000e+00> : vector<16x16xf32>
    %37 = tpu.matmul %36, %26, %cst_29 {dimension_numbers = #tpu.dot_dimension_numbers<[1], [0], [0], [1], [0, 0, 1, 1], [], []>, precision = #tpu.contract_precision<fp32>} : vector<16x16xf32>, vector<16x16xf32>, vector<16x16xf32> -> vector<16x16xf32>
    %c0_30 = arith.constant 0 : index
    %c0_31 = arith.constant 0 : index
    %c0_32 = arith.constant 0 : index
    %38 = vector.load %arg6[%c0_30, %c0_31, %c0_32] : memref<1x16x16xf32, #tpu.memory_space<vmem>>, vector<1x16x16xf32>
    %39 = vector.shape_cast %38 : vector<1x16x16xf32> to vector<16x16xf32>
    %40 = vector.shape_cast %37 : vector<16x16xf32> to vector<1x16x16xf32>
    tpu.vector_store %arg6[%c0_30, %c0_31, %c0_32], %40 {strides = array<i32>} : memref<1x16x16xf32, #tpu.memory_space<vmem>>, vector<1x16x16xf32>,
    return
  }
  func.func @transform_0(%arg0: i32) -> (i32, i32, i32) {
    %c0_i32 = arith.constant 0 : i32
    %c0_i32_0 = arith.constant 0 : i32
    %c0_i32_1 = arith.constant 0 : i32
    return %arg0, %c0_i32, %c0_i32_0 : i32, i32, i32
  }
  func.func @transform_1(%arg0: i32) -> (i32, i32, i32) {
    %c0_i32 = arith.constant 0 : i32
    %c0_i32_0 = arith.constant 0 : i32
    %c0_i32_1 = arith.constant 0 : i32
    return %arg0, %c0_i32, %c0_i32_0 : i32, i32, i32
  }
  func.func @transform_2(%arg0: i32) -> (i32, i32, i32) {
    %c0_i32 = arith.constant 0 : i32
    %c0_i32_0 = arith.constant 0 : i32
    %c0_i32_1 = arith.constant 0 : i32
    return %arg0, %c0_i32, %c0_i32_0 : i32, i32, i32
  }
  func.func @transform_3(%arg0: i32) -> (i32, i32, i32) {
    %c0_i32 = arith.constant 0 : i32
    %c0_i32_0 = arith.constant 0 : i32
    %c0_i32_1 = arith.constant 0 : i32
    %c0_i32_2 = arith.constant 0 : i32
    return %c0_i32, %c0_i32_0, %c0_i32_1 : i32, i32, i32
  }
  func.func @transform_4(%arg0: i32) -> (i32, i32, i32) {
    %c0_i32 = arith.constant 0 : i32
    %c0_i32_0 = arith.constant 0 : i32
    %c0_i32_1 = arith.constant 0 : i32
    %c0_i32_2 = arith.constant 0 : i32
    return %c0_i32, %c0_i32_0, %c0_i32_1 : i32, i32, i32
  }
  func.func @transform_5(%arg0: i32) -> (i32, i32, i32) {
    %c0_i32 = arith.constant 0 : i32
    %c0_i32_0 = arith.constant 0 : i32
    %c0_i32_1 = arith.constant 0 : i32
    return %arg0, %c0_i32, %c0_i32_0 : i32, i32, i32
  }
}

</mosaic_0001>

<llo_original>
// kernel: tpu_custom_call.1
$region0: #{tpu_custom_call.1}
  #allocation0 [shape = 'u32[]', space=smem, size = 0x4, offset = 0x4, fixed_abs, tag = 'smem constant byte address 0x4 - core index']
  #allocation1 [shape = 'u32[144,128]{1,0:T(1,128)}', space=vmem, size = 0x12000, scoped, tag = 'internal scratch']
  %s0 = inlined_call_operand.hbm [shape: f32[1,16,16], index: 0, kind: input, shape index: {}]
  %s1 = inlined_call_operand.hbm [shape: f32[1,16,16], index: 1, kind: input, shape index: {}]
  %s2 = inlined_call_operand.hbm [shape: f32[1,16,16], index: 2, kind: input, shape index: {}]
  %s3 = inlined_call_operand.hbm [shape: f32[3,16,16], index: 3, kind: input, shape index: {}]
  %s4 = inlined_call_operand.vmem [shape: f32[3,1,16], index: 4, kind: input, shape index: {}]
  %s5 = inlined_call_operand.hbm [shape: f32[1,16,16], index: 5, kind: output, shape index: {}]
  %s6 = sld [smem:[#allocation0]]
  $region46: #{tpu_custom_call.1} parent=0
    _
  %s8 = ssub.s32 1, %s6
  %s9 = scalar_select 0, %s8, %s6
  $region1: #{tpu_custom_call.1} parent=0
    #allocation2 [shape = 'u8[8192]{0}', space=vmem, size = 0x2000, scoped, tag = 'input window, operand 0, single buffered']
    #allocation3 [shape = 's32[1]{0}', space=sflag, size = 0x4, scoped, tag = 'scoped memory for tpu_custom_call.1']
    #allocation4 [shape = 's32[1]{0}', space=sflag, size = 0x4, scoped, tag = 'scoped memory for tpu_custom_call.1']
    #allocation5 [shape = 'u8[8192]{0}', space=vmem, size = 0x2000, scoped, tag = 'input window, operand 1, single buffered']
    #allocation6 [shape = 's32[1]{0}', space=sflag, size = 0x4, scoped, tag = 'scoped memory for tpu_custom_call.1']
    #allocation7 [shape = 'u8[8192]{0}', space=vmem, size = 0x2000, scoped, tag = 'input window, operand 2, single buffered']
    #allocation8 [shape = 'u8[24576]{0}', space=vmem, size = 0x6000, scoped, tag = 'input window, operand 3, single buffered']
    #allocation9 [shape = 's32[1]{0}', space=sflag, size = 0x4, scoped, tag = 'scoped memory for tpu_custom_call.1']
    #allocation10 [shape = 'u8[8192]{0}', space=vmem, size = 0x2000, scoped, tag = 'output window, operand 0, single buffered']
    %10 = vsyncpa [#allocation3], 0
    %11 = vsyncpa [#allocation6], 0
    %12 = vsyncpa [#allocation9], 0
    %13 = vsyncpa [#allocation4], 0
    // Predicated region
    $region2: #{tpu_custom_call.1} parent=1 // pred_check
      _
    $region3: #{tpu_custom_call.1} parent=1 // pred_check_branch
      %15 = sbr.rel (0) target = $region5
    $region4: #{tpu_custom_call.1} parent=1 // pred_region
      %s17 = ssub.s32 256, 256
      %18 = vsyncadd [#allocation3], %s17
      %s19 = sshll.u32 [#allocation2], 4
      %s20 = int_to_ptr.vmem [resolvable:$true] %s19
      %25 = dma.hbm_to_vmem [thread:$0]  %s0, 256, %s20, [#allocation3], 128, 128, 8
    $region5: #{tpu_custom_call.1} parent=1 // pred_fallthru
      _
    // Predicated region
    $region6: #{tpu_custom_call.1} parent=1 // pred_check
      _
    $region7: #{tpu_custom_call.1} parent=1 // pred_check_branch
      %27 = sbr.rel (0) target = $region9
    $region8: #{tpu_custom_call.1} parent=1 // pred_region
      %s29 = ssub.s32 256, 256
      %30 = vsyncadd [#allocation6], %s29
      %s31 = sshll.u32 [#allocation5], 4
      %s32 = int_to_ptr.vmem [resolvable:$true] %s31
      %37 = dma.hbm_to_vmem [thread:$0]  %s1, 256, %s32, [#allocation6], 128, 128, 8
    $region9: #{tpu_custom_call.1} parent=1 // pred_fallthru
      _
    // Predicated region
    $region10: #{tpu_custom_call.1} parent=1 // pred_check
      _
    $region11: #{tpu_custom_call.1} parent=1 // pred_check_branch
      %39 = sbr.rel (0) target = $region13
    $region12: #{tpu_custom_call.1} parent=1 // pred_region
      %s41 = ssub.s32 256, 256
      %42 = vsyncadd [#allocation6], %s41
      %s43 = sshll.u32 [#allocation7], 4
      %s44 = int_to_ptr.vmem [resolvable:$true] %s43
      %49 = dma.hbm_to_vmem [thread:$0]  %s2, 256, %s44, [#allocation6], 128, 128, 8
    $region13: #{tpu_custom_call.1} parent=1 // pred_fallthru
      _
    // Predicated region
    $region14: #{tpu_custom_call.1} parent=1 // pred_check
      _
    $region15: #{tpu_custom_call.1} parent=1 // pred_check_branch
      %51 = sbr.rel (0) target = $region17
    $region16: #{tpu_custom_call.1} parent=1 // pred_region
      %s53 = ssub.s32 768, 768
      %54 = vsyncadd [#allocation9], %s53
      %s55 = sshll.u32 [#allocation8], 4
      %s56 = int_to_ptr.vmem [resolvable:$true] %s55
      %61 = dma.hbm_to_vmem [thread:$0]  %s3, 768, %s56, [#allocation9], 128, 128, 8
    $region17: #{tpu_custom_call.1} parent=1 // pred_fallthru
      _
    // Predicated region
    $region18: #{tpu_custom_call.1} parent=1 // pred_check
      _
    $region19: #{tpu_custom_call.1} parent=1 // pred_check_branch
      %63 = sbr.rel (0) target = $region21
    $region20: #{tpu_custom_call.1} parent=1 // pred_region
      _
    $region21: #{tpu_custom_call.1} parent=1 // pred_fallthru
      _
    // Predicated region
    $region22: #{tpu_custom_call.1} parent=1 // pred_check
      _
    $region23: #{tpu_custom_call.1} parent=1 // pred_check_branch
      %65 = sbr.rel (0) target = $region25
    $region24: #{tpu_custom_call.1} parent=1 // pred_region
      %66 = dma.done [#allocation3], 256
    $region25: #{tpu_custom_call.1} parent=1 // pred_fallthru
      _
    // Predicated region
    $region26: #{tpu_custom_call.1} parent=1 // pred_check
      _
    $region27: #{tpu_custom_call.1} parent=1 // pred_check_branch
      %68 = sbr.rel (0) target = $region29
    $region28: #{tpu_custom_call.1} parent=1 // pred_region
      %69 = dma.done [#allocation6], 256
    $region29: #{tpu_custom_call.1} parent=1 // pred_fallthru
      _
    // Predicated region
    $region30: #{tpu_custom_call.1} parent=1 // pred_check
      _
    $region31: #{tpu_custom_call.1} parent=1 // pred_check_branch
      %71 = sbr.rel (0) target = $region33
    $region32: #{tpu_custom_call.1} parent=1 // pred_region
      %72 = dma.done [#allocation6], 256
    $region33: #{tpu_custom_call.1} parent=1 // pred_fallthru
      _
    // Predicated region
    $region34: #{tpu_custom_call.1} parent=1 // pred_check
      _
    $region35: #{tpu_custom_call.1} parent=1 // pred_check_branch
      %74 = sbr.rel (0) target = $region37
    $region36: #{tpu_custom_call.1} parent=1 // pred_region
      %75 = dma.done [#allocation9], 768
    $region37: #{tpu_custom_call.1} parent=1 // pred_fallthru
      _
    %v76 = vld [vmem:[#allocation2] sm:$0xff]
    %v77 = vld [vmem:[#allocation2 + $0x8] sm:$0xff]
    %v78 = vld [vmem:[#allocation5] sm:$0xff]
    %v79 = vld [vmem:[#allocation5 + $0x8] sm:$0xff]
    %v80 = vld [vmem:[#allocation7] sm:$0xff]
    %v81 = vld [vmem:[#allocation7 + $0x8] sm:$0xff]
    %v82 = vld [vmem:[#allocation8] sm:$0xff]
    %v83 = vld [vmem:[#allocation8 + $0x8] sm:$0xff]
    %v84 = vld [vmem:[%s4] sm:$0x1]
    %v86 = vlaneseq
    %v87 = vshrl.u32 %v86, 7
    %v88 = vsub.s32 0, %v87
    %v89 = vrot.slane %v84, %v88
    %vm91 = vcmask 130048
    %v93 = vsel %vm91, %v76, 0
    %v96 = vsel %vm91, %v77, 0
    %98 = vmatprep.subr.mxu0 0.0
    %99 = vmatpush1.msra.mxu0 0.0
    %100 = vmatprep.subr.mxu0 0.0
    %101 = vmatpush1.msra.mxu0 0.0
    %102 = vmatprep.subr.mxu0 0.0
    %103 = vmatpush1.msra.mxu0 0.0
    %104 = vmatprep.subr.mxu0 0.0
    %105 = vmatpush1.msra.mxu0 0.0
    %106 = vmatprep.subr.mxu0 0.0
    %107 = vmatpush1.msra.mxu0 0.0
    %108 = vmatprep.subr.mxu0 0.0
    %109 = vmatpush1.msra.mxu0 0.0
    %110 = vmatprep.subr.mxu0 0.0
    %111 = vmatpush1.msra.mxu0 0.0
    %112 = vmatprep.subr.mxu0 0.0
    %113 = vmatpush1.msra.mxu0 0.0
    %114 = vmatprep.subr.mxu0 0.0
    %115 = vmatpush1.msra.mxu0 0.0
    %116 = vmatprep.subr.mxu0 0.0
    %117 = vmatpush1.msra.mxu0 0.0
    %118 = vmatprep.subr.mxu0 0.0
    %119 = vmatpush1.msra.mxu0 0.0
    %120 = vmatprep.subr.mxu0 0.0
    %121 = vmatpush1.msra.mxu0 0.0
    %122 = vmatprep.subr.mxu0 0.0
    %123 = vmatpush1.msra.mxu0 0.0
    %124 = vmatprep.subr.mxu0 0.0
    %125 = vmatpush1.msra.mxu0 0.0
    %126 = vmatprep.subr.mxu0 0.0
    %v127 = vand.u32 %v83, 4294901760
    %128 = vmatpush1.msra.mxu0 %v127
    %129 = vmatprep.subr.mxu0 0.0
    %v130 = vand.u32 %v82, 4294901760
    %131 = vmatpush1.msra.mxu0 %v130
    %132 = vmatprep.subr.mxu0 0.0
    %133 = vmatpush2.msra.mxu0 0.0
    %134 = vmatprep.subr.mxu0 0.0
    %135 = vmatpush2.msra.mxu0 0.0
    %136 = vmatprep.subr.mxu0 0.0
    %137 = vmatpush2.msra.mxu0 0.0
    %138 = vmatprep.subr.mxu0 0.0
    %139 = vmatpush2.msra.mxu0 0.0
    %140 = vmatprep.subr.mxu0 0.0
    %141 = vmatpush2.msra.mxu0 0.0
    %142 = vmatprep.subr.mxu0 0.0
    %143 = vmatpush2.msra.mxu0 0.0
    %144 = vmatprep.subr.mxu0 0.0
    %145 = vmatpush2.msra.mxu0 0.0
    %146 = vmatprep.subr.mxu0 0.0
    %147 = vmatpush2.msra.mxu0 0.0
    %148 = vmatprep.subr.mxu0 0.0
    %149 = vmatpush2.msra.mxu0 0.0
    %150 = vmatprep.subr.mxu0 0.0
    %151 = vmatpush2.msra.mxu0 0.0
    %152 = vmatprep.subr.mxu0 0.0
    %153 = vmatpush2.msra.mxu0 0.0
    %154 = vmatprep.subr.mxu0 0.0
    %155 = vmatpush2.msra.mxu0 0.0
    %156 = vmatprep.subr.mxu0 0.0
    %157 = vmatpush2.msra.mxu0 0.0
    %158 = vmatprep.subr.mxu0 0.0
    %159 = vmatpush2.msra.mxu0 0.0
    %160 = vmatprep.subr.mxu0 0.0
    %161 = vmatpush2.msra.mxu0 0.0
    %162 = vmatprep.subr.mxu0 0.0
    %163 = vmatpush2.msra.mxu0 0.0
    %164 = vmatprep.mubr.f32.mxu0 0.0
    %v165 = vand.u32 %v93, 4294901760
    %v166 = vsub.f32 %v93, %v165
    %v167 = vand.u32 %v166, 4294901760
    %v168 = vsub.f32 %v166, %v167
    %v169 = vand.u32 %v168, 4294901760
    %170 = vmatmul.mubr.f32.gmra.mxu0 %v169
    %v171 = vpop.f32.mrf.mxu0
    %v172 = vadd.f32 %v89, %v171
    %v173 = vpop.f32.mrf.mxu0
    %174 = vmatprep.mubr.f32.mxu0 0.0
    %v175 = vand.u32 %v96, 4294901760
    %v176 = vsub.f32 %v96, %v175
    %v177 = vand.u32 %v176, 4294901760
    %v178 = vsub.f32 %v176, %v177
    %v179 = vand.u32 %v178, 4294901760
    %180 = vmatmul.mubr.f32.gmra.mxu0 %v179
    %v181 = vpop.f32.mrf.mxu0
    %v182 = vadd.f32 %v89, %v181
    %v183 = vpop.f32.mrf.mxu0
    %184 = vdwg.mxu0
    %185 = vmatprep.subr.mxu0 0.0
    %186 = vmatpush1.msra.mxu0 0.0
    %187 = vmatprep.subr.mxu0 0.0
    %188 = vmatpush1.msra.mxu0 0.0
    %189 = vmatprep.subr.mxu0 0.0
    %190 = vmatpush1.msra.mxu0 0.0
    %191 = vmatprep.subr.mxu0 0.0
    %192 = vmatpush1.msra.mxu0 0.0
    %193 = vmatprep.subr.mxu0 0.0
    %194 = vmatpush1.msra.mxu0 0.0
    %195 = vmatprep.subr.mxu0 0.0
    %196 = vmatpush1.msra.mxu0 0.0
    %197 = vmatprep.subr.mxu0 0.0
    %198 = vmatpush1.msra.mxu0 0.0
    %199 = vmatprep.subr.mxu0 0.0
    %200 = vmatpush1.msra.mxu0 0.0
    %201 = vmatprep.subr.mxu0 0.0
    %202 = vmatpush1.msra.mxu0 0.0
    %203 = vmatprep.subr.mxu0 0.0
    %204 = vmatpush1.msra.mxu0 0.0
    %205 = vmatprep.subr.mxu0 0.0
    %206 = vmatpush1.msra.mxu0 0.0
    %207 = vmatprep.subr.mxu0 0.0
    %208 = vmatpush1.msra.mxu0 0.0
    %209 = vmatprep.subr.mxu0 0.0
    %210 = vmatpush1.msra.mxu0 0.0
    %211 = vmatprep.subr.mxu0 0.0
    %212 = vmatpush1.msra.mxu0 0.0
    %213 = vmatprep.subr.mxu0 0.0
    %v214 = vand.u32 %v83, 4294901760
    %v215 = vsub.f32 %v83, %v214
    %v216 = vand.u32 %v215, 4294901760
    %v217 = vsub.f32 %v215, %v216
    %v218 = vand.u32 %v217, 4294901760
    %219 = vmatpush1.msra.mxu0 %v218
    %220 = vmatprep.subr.mxu0 0.0
    %v221 = vand.u32 %v82, 4294901760
    %v222 = vsub.f32 %v82, %v221
    %v223 = vand.u32 %v222, 4294901760
    %v224 = vsub.f32 %v222, %v223
    %v225 = vand.u32 %v224, 4294901760
    %226 = vmatpush1.msra.mxu0 %v225
    %227 = vmatprep.subr.mxu0 0.0
    %228 = vmatpush2.msra.mxu0 0.0
    %229 = vmatprep.subr.mxu0 0.0
    %230 = vmatpush2.msra.mxu0 0.0
    %231 = vmatprep.subr.mxu0 0.0
    %232 = vmatpush2.msra.mxu0 0.0
    %233 = vmatprep.subr.mxu0 0.0
    %234 = vmatpush2.msra.mxu0 0.0
    %235 = vmatprep.subr.mxu0 0.0
    %236 = vmatpush2.msra.mxu0 0.0
    %237 = vmatprep.subr.mxu0 0.0
    %238 = vmatpush2.msra.mxu0 0.0
    %239 = vmatprep.subr.mxu0 0.0
    %240 = vmatpush2.msra.mxu0 0.0
    %241 = vmatprep.subr.mxu0 0.0
    %242 = vmatpush2.msra.mxu0 0.0
    %243 = vmatprep.subr.mxu0 0.0
    %244 = vmatpush2.msra.mxu0 0.0
    %245 = vmatprep.subr.mxu0 0.0
    %246 = vmatpush2.msra.mxu0 0.0
    %247 = vmatprep.subr.mxu0 0.0
    %248 = vmatpush2.msra.mxu0 0.0
    %249 = vmatprep.subr.mxu0 0.0
    %250 = vmatpush2.msra.mxu0 0.0
    %251 = vmatprep.subr.mxu0 0.0
    %252 = vmatpush2.msra.mxu0 0.0
    %253 = vmatprep.subr.mxu0 0.0
    %254 = vmatpush2.msra.mxu0 0.0
    %255 = vmatprep.subr.mxu0 0.0
    %256 = vmatpush2.msra.mxu0 0.0
    %257 = vmatprep.subr.mxu0 0.0
    %258 = vmatpush2.msra.mxu0 0.0
    %259 = vmatprep.mubr.f32.mxu0 0.0
    %v260 = vand.u32 %v93, 4294901760
    %261 = vmatmul.mubr.f32.gmra.mxu0 %v260
    %v262 = vpop.f32.mrf.mxu0
    %v263 = vadd.f32 %v172, %v262
    %v264 = vpop.f32.mrf.mxu0
    %265 = vmatprep.mubr.f32.mxu0 0.0
    %v266 = vand.u32 %v96, 4294901760
    %267 = vmatmul.mubr.f32.gmra.mxu0 %v266
    %v268 = vpop.f32.mrf.mxu0
    %v269 = vadd.f32 %v182, %v268
    %v270 = vpop.f32.mrf.mxu0
    %271 = vdwg.mxu0
    %272 = vmatprep.subr.mxu0 0.0
    %273 = vmatpush1.msra.mxu0 0.0
    %274 = vmatprep.subr.mxu0 0.0
    %275 = vmatpush1.msra.mxu0 0.0
    %276 = vmatprep.subr.mxu0 0.0
    %277 = vmatpush1.msra.mxu0 0.0
    %278 = vmatprep.subr.mxu0 0.0
    %279 = vmatpush1.msra.mxu0 0.0
    %280 = vmatprep.subr.mxu0 0.0
    %281 = vmatpush1.msra.mxu0 0.0
    %282 = vmatprep.subr.mxu0 0.0
    %283 = vmatpush1.msra.mxu0 0.0
    %284 = vmatprep.subr.mxu0 0.0
    %285 = vmatpush1.msra.mxu0 0.0
    %286 = vmatprep.subr.mxu0 0.0
    %287 = vmatpush1.msra.mxu0 0.0
    %288 = vmatprep.subr.mxu0 0.0
    %289 = vmatpush1.msra.mxu0 0.0
    %290 = vmatprep.subr.mxu0 0.0
    %291 = vmatpush1.msra.mxu0 0.0
    %292 = vmatprep.subr.mxu0 0.0
    %293 = vmatpush1.msra.mxu0 0.0
    %294 = vmatprep.subr.mxu0 0.0
    %295 = vmatpush1.msra.mxu0 0.0
    %296 = vmatprep.subr.mxu0 0.0
    %297 = vmatpush1.msra.mxu0 0.0
    %298 = vmatprep.subr.mxu0 0.0
    %299 = vmatpush1.msra.mxu0 0.0
    %300 = vmatprep.subr.mxu0 0.0
    %v301 = vand.u32 %v83, 4294901760
    %v302 = vsub.f32 %v83, %v301
    %303 = vmatpush1.msra.mxu0 %v302
    %304 = vmatprep.subr.mxu0 0.0
    %v305 = vand.u32 %v82, 4294901760
    %v306 = vsub.f32 %v82, %v305
    %307 = vmatpush1.msra.mxu0 %v306
    %308 = vmatprep.subr.mxu0 0.0
    %309 = vmatpush2.msra.mxu0 0.0
    %310 = vmatprep.subr.mxu0 0.0
    %311 = vmatpush2.msra.mxu0 0.0
    %312 = vmatprep.subr.mxu0 0.0
    %313 = vmatpush2.msra.mxu0 0.0
    %314 = vmatprep.subr.mxu0 0.0
    %315 = vmatpush2.msra.mxu0 0.0
    %316 = vmatprep.subr.mxu0 0.0
    %317 = vmatpush2.msra.mxu0 0.0
    %318 = vmatprep.subr.mxu0 0.0
    %319 = vmatpush2.msra.mxu0 0.0
    %320 = vmatprep.subr.mxu0 0.0
    %321 = vmatpush2.msra.mxu0 0.0
    %322 = vmatprep.subr.mxu0 0.0
    %323 = vmatpush2.msra.mxu0 0.0
    %324 = vmatprep.subr.mxu0 0.0
    %325 = vmatpush2.msra.mxu0 0.0
    %326 = vmatprep.subr.mxu0 0.0
    %327 = vmatpush2.msra.mxu0 0.0
    %328 = vmatprep.subr.mxu0 0.0
    %329 = vmatpush2.msra.mxu0 0.0
    %330 = vmatprep.subr.mxu0 0.0
    %331 = vmatpush2.msra.mxu0 0.0
    %332 = vmatprep.subr.mxu0 0.0
    %333 = vmatpush2.msra.mxu0 0.0
    %334 = vmatprep.subr.mxu0 0.0
    %335 = vmatpush2.msra.mxu0 0.0
    %336 = vmatprep.subr.mxu0 0.0
    %337 = vmatpush2.msra.mxu0 0.0
    %338 = vmatprep.subr.mxu0 0.0
    %339 = vmatpush2.msra.mxu0 0.0
    %340 = vmatprep.mubr.f32.mxu0 0.0
    %v341 = vand.u32 %v93, 4294901760
    %v342 = vsub.f32 %v93, %v341
    %343 = vmatmul.mubr.f32.gmra.mxu0 %v342
    %v344 = vpop.f32.mrf.mxu0
    %v345 = vadd.f32 %v263, %v344
    %v346 = vpop.f32.mrf.mxu0
    %347 = vmatprep.mubr.f32.mxu0 0.0
    %v348 = vand.u32 %v96, 4294901760
    %v349 = vsub.f32 %v96, %v348
    %350 = vmatmul.mubr.f32.gmra.mxu0 %v349
    %v351 = vpop.f32.mrf.mxu0
    %v352 = vadd.f32 %v269, %v351
    %v353 = vpop.f32.mrf.mxu0
    %354 = vdwg.mxu0
    %355 = vmatprep.subr.mxu0 0.0
    %356 = vmatpush1.msra.mxu0 0.0
    %357 = vmatprep.subr.mxu0 0.0
    %358 = vmatpush1.msra.mxu0 0.0
    %359 = vmatprep.subr.mxu0 0.0
    %360 = vmatpush1.msra.mxu0 0.0
    %361 = vmatprep.subr.mxu0 0.0
    %362 = vmatpush1.msra.mxu0 0.0
    %363 = vmatprep.subr.mxu0 0.0
    %364 = vmatpush1.msra.mxu0 0.0
    %365 = vmatprep.subr.mxu0 0.0
    %366 = vmatpush1.msra.mxu0 0.0
    %367 = vmatprep.subr.mxu0 0.0
    %368 = vmatpush1.msra.mxu0 0.0
    %369 = vmatprep.subr.mxu0 0.0
    %370 = vmatpush1.msra.mxu0 0.0
    %371 = vmatprep.subr.mxu0 0.0
    %372 = vmatpush1.msra.mxu0 0.0
    %373 = vmatprep.subr.mxu0 0.0
    %374 = vmatpush1.msra.mxu0 0.0
    %375 = vmatprep.subr.mxu0 0.0
    %376 = vmatpush1.msra.mxu0 0.0
    %377 = vmatprep.subr.mxu0 0.0
    %378 = vmatpush1.msra.mxu0 0.0
    %379 = vmatprep.subr.mxu0 0.0
    %380 = vmatpush1.msra.mxu0 0.0
    %381 = vmatprep.subr.mxu0 0.0
    %382 = vmatpush1.msra.mxu0 0.0
    %383 = vmatprep.subr.mxu0 0.0
    %v384 = vand.u32 %v83, 4294901760
    %385 = vmatpush1.msra.mxu0 %v384
    %386 = vmatprep.subr.mxu0 0.0
    %v387 = vand.u32 %v82, 4294901760
    %388 = vmatpush1.msra.mxu0 %v387
    %389 = vmatprep.subr.mxu0 0.0
    %390 = vmatpush2.msra.mxu0 0.0
    %391 = vmatprep.subr.mxu0 0.0
    %392 = vmatpush2.msra.mxu0 0.0
    %393 = vmatprep.subr.mxu0 0.0
    %394 = vmatpush2.msra.mxu0 0.0
    %395 = vmatprep.subr.mxu0 0.0
    %396 = vmatpush2.msra.mxu0 0.0
    %397 = vmatprep.subr.mxu0 0.0
    %398 = vmatpush2.msra.mxu0 0.0
    %399 = vmatprep.subr.mxu0 0.0
    %400 = vmatpush2.msra.mxu0 0.0
    %401 = vmatprep.subr.mxu0 0.0
    %402 = vmatpush2.msra.mxu0 0.0
    %403 = vmatprep.subr.mxu0 0.0
    %404 = vmatpush2.msra.mxu0 0.0
    %405 = vmatprep.subr.mxu0 0.0
    %406 = vmatpush2.msra.mxu0 0.0
    %407 = vmatprep.subr.mxu0 0.0
    %408 = vmatpush2.msra.mxu0 0.0
    %409 = vmatprep.subr.mxu0 0.0
    %410 = vmatpush2.msra.mxu0 0.0
    %411 = vmatprep.subr.mxu0 0.0
    %412 = vmatpush2.msra.mxu0 0.0
    %413 = vmatprep.subr.mxu0 0.0
    %414 = vmatpush2.msra.mxu0 0.0
    %415 = vmatprep.subr.mxu0 0.0
    %416 = vmatpush2.msra.mxu0 0.0
    %417 = vmatprep.subr.mxu0 0.0
    %418 = vmatpush2.msra.mxu0 0.0
    %419 = vmatprep.subr.mxu0 0.0
    %420 = vmatpush2.msra.mxu0 0.0
    %421 = vmatprep.mubr.f32.mxu0 0.0
    %v422 = vand.u32 %v93, 4294901760
    %v423 = vsub.f32 %v93, %v422
    %v424 = vand.u32 %v423, 4294901760
    %425 = vmatmul.mubr.f32.gmra.mxu0 %v424
    %v426 = vpop.f32.mrf.mxu0
    %v427 = vadd.f32 %v345, %v426
    %v428 = vpop.f32.mrf.mxu0
    %429 = vmatprep.mubr.f32.mxu0 0.0
    %v430 = vand.u32 %v96, 4294901760
    %v431 = vsub.f32 %v96, %v430
    %v432 = vand.u32 %v431, 4294901760
    %433 = vmatmul.mubr.f32.gmra.mxu0 %v432
    %v434 = vpop.f32.mrf.mxu0
    %v435 = vadd.f32 %v352, %v434
    %v436 = vpop.f32.mrf.mxu0
    %437 = vdwg.mxu0
    %438 = vmatprep.subr.mxu0 0.0
    %439 = vmatpush1.msra.mxu0 0.0
    %440 = vmatprep.subr.mxu0 0.0
    %441 = vmatpush1.msra.mxu0 0.0
    %442 = vmatprep.subr.mxu0 0.0
    %443 = vmatpush1.msra.mxu0 0.0
    %444 = vmatprep.subr.mxu0 0.0
    %445 = vmatpush1.msra.mxu0 0.0
    %446 = vmatprep.subr.mxu0 0.0
    %447 = vmatpush1.msra.mxu0 0.0
    %448 = vmatprep.subr.mxu0 0.0
    %449 = vmatpush1.msra.mxu0 0.0
    %450 = vmatprep.subr.mxu0 0.0
    %451 = vmatpush1.msra.mxu0 0.0
    %452 = vmatprep.subr.mxu0 0.0
    %453 = vmatpush1.msra.mxu0 0.0
    %454 = vmatprep.subr.mxu0 0.0
    %455 = vmatpush1.msra.mxu0 0.0
    %456 = vmatprep.subr.mxu0 0.0
    %457 = vmatpush1.msra.mxu0 0.0
    %458 = vmatprep.subr.mxu0 0.0
    %459 = vmatpush1.msra.mxu0 0.0
    %460 = vmatprep.subr.mxu0 0.0
    %461 = vmatpush1.msra.mxu0 0.0
    %462 = vmatprep.subr.mxu0 0.0
    %463 = vmatpush1.msra.mxu0 0.0
    %464 = vmatprep.subr.mxu0 0.0
    %465 = vmatpush1.msra.mxu0 0.0
    %466 = vmatprep.subr.mxu0 0.0
    %v467 = vand.u32 %v83, 4294901760
    %v468 = vsub.f32 %v83, %v467
    %v469 = vand.u32 %v468, 4294901760
    %470 = vmatpush1.msra.mxu0 %v469
    %471 = vmatprep.subr.mxu0 0.0
    %v472 = vand.u32 %v82, 4294901760
    %v473 = vsub.f32 %v82, %v472
    %v474 = vand.u32 %v473, 4294901760
    %475 = vmatpush1.msra.mxu0 %v474
    %476 = vmatprep.subr.mxu0 0.0
    %477 = vmatpush2.msra.mxu0 0.0
    %478 = vmatprep.subr.mxu0 0.0
    %479 = vmatpush2.msra.mxu0 0.0
    %480 = vmatprep.subr.mxu0 0.0
    %481 = vmatpush2.msra.mxu0 0.0
    %482 = vmatprep.subr.mxu0 0.0
    %483 = vmatpush2.msra.mxu0 0.0
    %484 = vmatprep.subr.mxu0 0.0
    %485 = vmatpush2.msra.mxu0 0.0
    %486 = vmatprep.subr.mxu0 0.0
    %487 = vmatpush2.msra.mxu0 0.0
    %488 = vmatprep.subr.mxu0 0.0
    %489 = vmatpush2.msra.mxu0 0.0
    %490 = vmatprep.subr.mxu0 0.0
    %491 = vmatpush2.msra.mxu0 0.0
    %492 = vmatprep.subr.mxu0 0.0
    %493 = vmatpush2.msra.mxu0 0.0
    %494 = vmatprep.subr.mxu0 0.0
    %495 = vmatpush2.msra.mxu0 0.0
    %496 = vmatprep.subr.mxu0 0.0
    %497 = vmatpush2.msra.mxu0 0.0
    %498 = vmatprep.subr.mxu0 0.0
    %499 = vmatpush2.msra.mxu0 0.0
    %500 = vmatprep.subr.mxu0 0.0
    %501 = vmatpush2.msra.mxu0 0.0
    %502 = vmatprep.subr.mxu0 0.0
    %503 = vmatpush2.msra.mxu0 0.0
    %504 = vmatprep.subr.mxu0 0.0
    %505 = vmatpush2.msra.mxu0 0.0
    %506 = vmatprep.subr.mxu0 0.0
    %507 = vmatpush2.msra.mxu0 0.0
    %508 = vmatprep.mubr.f32.mxu0 0.0
    %v509 = vand.u32 %v93, 4294901760
    %510 = vmatmul.mubr.f32.gmra.mxu0 %v509
    %v511 = vpop.f32.mrf.mxu0
    %v512 = vadd.f32 %v427, %v511
    %v513 = vpop.f32.mrf.mxu0
    %514 = vmatprep.mubr.f32.mxu0 0.0
    %v515 = vand.u32 %v96, 4294901760
    %516 = vmatmul.mubr.f32.gmra.mxu0 %v515
    %v517 = vpop.f32.mrf.mxu0
    %v518 = vadd.f32 %v435, %v517
    %v519 = vpop.f32.mrf.mxu0
    %520 = vdwg.mxu0
    %521 = vmatprep.subr.mxu0 0.0
    %522 = vmatpush1.msra.mxu0 0.0
    %523 = vmatprep.subr.mxu0 0.0
    %524 = vmatpush1.msra.mxu0 0.0
    %525 = vmatprep.subr.mxu0 0.0
    %526 = vmatpush1.msra.mxu0 0.0
    %527 = vmatprep.subr.mxu0 0.0
    %528 = vmatpush1.msra.mxu0 0.0
    %529 = vmatprep.subr.mxu0 0.0
    %530 = vmatpush1.msra.mxu0 0.0
    %531 = vmatprep.subr.mxu0 0.0
    %532 = vmatpush1.msra.mxu0 0.0
    %533 = vmatprep.subr.mxu0 0.0
    %534 = vmatpush1.msra.mxu0 0.0
    %535 = vmatprep.subr.mxu0 0.0
    %536 = vmatpush1.msra.mxu0 0.0
    %537 = vmatprep.subr.mxu0 0.0
    %538 = vmatpush1.msra.mxu0 0.0
    %539 = vmatprep.subr.mxu0 0.0
    %540 = vmatpush1.msra.mxu0 0.0
    %541 = vmatprep.subr.mxu0 0.0
    %542 = vmatpush1.msra.mxu0 0.0
    %543 = vmatprep.subr.mxu0 0.0
    %544 = vmatpush1.msra.mxu0 0.0
    %545 = vmatprep.subr.mxu0 0.0
    %546 = vmatpush1.msra.mxu0 0.0
    %547 = vmatprep.subr.mxu0 0.0
    %548 = vmatpush1.msra.mxu0 0.0
    %549 = vmatprep.subr.mxu0 0.0
    %v550 = vand.u32 %v83, 4294901760
    %551 = vmatpush1.msra.mxu0 %v550
    %552 = vmatprep.subr.mxu0 0.0
    %v553 = vand.u32 %v82, 4294901760
    %554 = vmatpush1.msra.mxu0 %v553
    %555 = vmatprep.subr.mxu0 0.0
    %556 = vmatpush2.msra.mxu0 0.0
    %557 = vmatprep.subr.mxu0 0.0
    %558 = vmatpush2.msra.mxu0 0.0
    %559 = vmatprep.subr.mxu0 0.0
    %560 = vmatpush2.msra.mxu0 0.0
    %561 = vmatprep.subr.mxu0 0.0
    %562 = vmatpush2.msra.mxu0 0.0
    %563 = vmatprep.subr.mxu0 0.0
    %564 = vmatpush2.msra.mxu0 0.0
    %565 = vmatprep.subr.mxu0 0.0
    %566 = vmatpush2.msra.mxu0 0.0
    %567 = vmatprep.subr.mxu0 0.0
    %568 = vmatpush2.msra.mxu0 0.0
    %569 = vmatprep.subr.mxu0 0.0
    %570 = vmatpush2.msra.mxu0 0.0
    %571 = vmatprep.subr.mxu0 0.0
    %572 = vmatpush2.msra.mxu0 0.0
    %573 = vmatprep.subr.mxu0 0.0
    %574 = vmatpush2.msra.mxu0 0.0
    %575 = vmatprep.subr.mxu0 0.0
    %576 = vmatpush2.msra.mxu0 0.0
    %577 = vmatprep.subr.mxu0 0.0
    %578 = vmatpush2.msra.mxu0 0.0
    %579 = vmatprep.subr.mxu0 0.0
    %580 = vmatpush2.msra.mxu0 0.0
    %581 = vmatprep.subr.mxu0 0.0
    %582 = vmatpush2.msra.mxu0 0.0
    %583 = vmatprep.subr.mxu0 0.0
    %584 = vmatpush2.msra.mxu0 0.0
    %585 = vmatprep.subr.mxu0 0.0
    %586 = vmatpush2.msra.mxu0 0.0
    %587 = vmatprep.mubr.f32.mxu0 0.0
    %v588 = vand.u32 %v93, 4294901760
    %589 = vmatmul.mubr.f32.gmra.mxu0 %v588
    %v590 = vpop.f32.mrf.mxu0
    %v591 = vadd.f32 %v512, %v590
    %v592 = vpop.f32.mrf.mxu0
    %593 = vmatprep.mubr.f32.mxu0 0.0
    %v594 = vand.u32 %v96, 4294901760
    %595 = vmatmul.mubr.f32.gmra.mxu0 %v594
    %v596 = vpop.f32.mrf.mxu0
    %v597 = vadd.f32 %v518, %v596
    %v598 = vpop.f32.mrf.mxu0
    %599 = vdwg.mxu0
    %s600 = scalar_lea.vmem [#allocation8], 16
    %v601 = vld [vmem:[%s600] sm:$0xff]
    %v602 = vld [vmem:[%s600 + $0x8] sm:$0xff]
    %s603 = scalar_lea.vmem %s4, 1
    %v604 = vld [vmem:[%s603] sm:$0x1]
    %v606 = vlaneseq
    %v607 = vshrl.u32 %v606, 7
    %v608 = vsub.s32 0, %v607
    %v609 = vrot.slane %v604, %v608
    %v612 = vsel %vm91, %v78, 0
    %v615 = vsel %vm91, %v79, 0
    %617 = vmatprep.subr.mxu0 0.0
    %618 = vmatpush1.msra.mxu0 0.0
    %619 = vmatprep.subr.mxu0 0.0
    %620 = vmatpush1.msra.mxu0 0.0
    %621 = vmatprep.subr.mxu0 0.0
    %622 = vmatpush1.msra.mxu0 0.0
    %623 = vmatprep.subr.mxu0 0.0
    %624 = vmatpush1.msra.mxu0 0.0
    %625 = vmatprep.subr.mxu0 0.0
    %626 = vmatpush1.msra.mxu0 0.0
    %627 = vmatprep.subr.mxu0 0.0
    %628 = vmatpush1.msra.mxu0 0.0
    %629 = vmatprep.subr.mxu0 0.0
    %630 = vmatpush1.msra.mxu0 0.0
    %631 = vmatprep.subr.mxu0 0.0
    %632 = vmatpush1.msra.mxu0 0.0
    %633 = vmatprep.subr.mxu0 0.0
    %634 = vmatpush1.msra.mxu0 0.0
    %635 = vmatprep.subr.mxu0 0.0
    %636 = vmatpush1.msra.mxu0 0.0
    %637 = vmatprep.subr.mxu0 0.0
    %638 = vmatpush1.msra.mxu0 0.0
    %639 = vmatprep.subr.mxu0 0.0
    %640 = vmatpush1.msra.mxu0 0.0
    %641 = vmatprep.subr.mxu0 0.0
    %642 = vmatpush1.msra.mxu0 0.0
    %643 = vmatprep.subr.mxu0 0.0
    %644 = vmatpush1.msra.mxu0 0.0
    %645 = vmatprep.subr.mxu0 0.0
    %v646 = vand.u32 %v602, 4294901760
    %647 = vmatpush1.msra.mxu0 %v646
    %648 = vmatprep.subr.mxu0 0.0
    %v649 = vand.u32 %v601, 4294901760
    %650 = vmatpush1.msra.mxu0 %v649
    %651 = vmatprep.subr.mxu0 0.0
    %652 = vmatpush2.msra.mxu0 0.0
    %653 = vmatprep.subr.mxu0 0.0
    %654 = vmatpush2.msra.mxu0 0.0
    %655 = vmatprep.subr.mxu0 0.0
    %656 = vmatpush2.msra.mxu0 0.0
    %657 = vmatprep.subr.mxu0 0.0
    %658 = vmatpush2.msra.mxu0 0.0
    %659 = vmatprep.subr.mxu0 0.0
    %660 = vmatpush2.msra.mxu0 0.0
    %661 = vmatprep.subr.mxu0 0.0
    %662 = vmatpush2.msra.mxu0 0.0
    %663 = vmatprep.subr.mxu0 0.0
    %664 = vmatpush2.msra.mxu0 0.0
    %665 = vmatprep.subr.mxu0 0.0
    %666 = vmatpush2.msra.mxu0 0.0
    %667 = vmatprep.subr.mxu0 0.0
    %668 = vmatpush2.msra.mxu0 0.0
    %669 = vmatprep.subr.mxu0 0.0
    %670 = vmatpush2.msra.mxu0 0.0
    %671 = vmatprep.subr.mxu0 0.0
    %672 = vmatpush2.msra.mxu0 0.0
    %673 = vmatprep.subr.mxu0 0.0
    %674 = vmatpush2.msra.mxu0 0.0
    %675 = vmatprep.subr.mxu0 0.0
    %676 = vmatpush2.msra.mxu0 0.0
    %677 = vmatprep.subr.mxu0 0.0
    %678 = vmatpush2.msra.mxu0 0.0
    %679 = vmatprep.subr.mxu0 0.0
    %680 = vmatpush2.msra.mxu0 0.0
    %681 = vmatprep.subr.mxu0 0.0
    %682 = vmatpush2.msra.mxu0 0.0
    %683 = vmatprep.mubr.f32.mxu0 0.0
    %v684 = vand.u32 %v612, 4294901760
    %v685 = vsub.f32 %v612, %v684
    %v686 = vand.u32 %v685, 4294901760
    %v687 = vsub.f32 %v685, %v686
    %v688 = vand.u32 %v687, 4294901760
    %689 = vmatmul.mubr.f32.gmra.mxu0 %v688
    %v690 = vpop.f32.mrf.mxu0
    %v691 = vadd.f32 %v609, %v690
    %v692 = vpop.f32.mrf.mxu0
    %693 = vmatprep.mubr.f32.mxu0 0.0
    %v694 = vand.u32 %v615, 4294901760
    %v695 = vsub.f32 %v615, %v694
    %v696 = vand.u32 %v695, 4294901760
    %v697 = vsub.f32 %v695, %v696
    %v698 = vand.u32 %v697, 4294901760
    %699 = vmatmul.mubr.f32.gmra.mxu0 %v698
    %v700 = vpop.f32.mrf.mxu0
    %v701 = vadd.f32 %v609, %v700
    %v702 = vpop.f32.mrf.mxu0
    %703 = vdwg.mxu0
    %704 = vmatprep.subr.mxu0 0.0
    %705 = vmatpush1.msra.mxu0 0.0
    %706 = vmatprep.subr.mxu0 0.0
    %707 = vmatpush1.msra.mxu0 0.0
    %708 = vmatprep.subr.mxu0 0.0
    %709 = vmatpush1.msra.mxu0 0.0
    %710 = vmatprep.subr.mxu0 0.0
    %711 = vmatpush1.msra.mxu0 0.0
    %712 = vmatprep.subr.mxu0 0.0
    %713 = vmatpush1.msra.mxu0 0.0
    %714 = vmatprep.subr.mxu0 0.0
    %715 = vmatpush1.msra.mxu0 0.0
    %716 = vmatprep.subr.mxu0 0.0
    %717 = vmatpush1.msra.mxu0 0.0
    %718 = vmatprep.subr.mxu0 0.0
    %719 = vmatpush1.msra.mxu0 0.0
    %720 = vmatprep.subr.mxu0 0.0
    %721 = vmatpush1.msra.mxu0 0.0
    %722 = vmatprep.subr.mxu0 0.0
    %723 = vmatpush1.msra.mxu0 0.0
    %724 = vmatprep.subr.mxu0 0.0
    %725 = vmatpush1.msra.mxu0 0.0
    %726 = vmatprep.subr.mxu0 0.0
    %727 = vmatpush1.msra.mxu0 0.0
    %728 = vmatprep.subr.mxu0 0.0
    %729 = vmatpush1.msra.mxu0 0.0
    %730 = vmatprep.subr.mxu0 0.0
    %731 = vmatpush1.msra.mxu0 0.0
    %732 = vmatprep.subr.mxu0 0.0
    %v733 = vand.u32 %v602, 4294901760
    %v734 = vsub.f32 %v602, %v733
    %v735 = vand.u32 %v734, 4294901760
    %v736 = vsub.f32 %v734, %v735
    %v737 = vand.u32 %v736, 4294901760
    %738 = vmatpush1.msra.mxu0 %v737
    %739 = vmatprep.subr.mxu0 0.0
    %v740 = vand.u32 %v601, 4294901760
    %v741 = vsub.f32 %v601, %v740
    %v742 = vand.u32 %v741, 4294901760
    %v743 = vsub.f32 %v741, %v742
    %v744 = vand.u32 %v743, 4294901760
    %745 = vmatpush1.msra.mxu0 %v744
    %746 = vmatprep.subr.mxu0 0.0
    %747 = vmatpush2.msra.mxu0 0.0
    %748 = vmatprep.subr.mxu0 0.0
    %749 = vmatpush2.msra.mxu0 0.0
    %750 = vmatprep.subr.mxu0 0.0
    %751 = vmatpush2.msra.mxu0 0.0
    %752 = vmatprep.subr.mxu0 0.0
    %753 = vmatpush2.msra.mxu0 0.0
    %754 = vmatprep.subr.mxu0 0.0
    %755 = vmatpush2.msra.mxu0 0.0
    %756 = vmatprep.subr.mxu0 0.0
    %757 = vmatpush2.msra.mxu0 0.0
    %758 = vmatprep.subr.mxu0 0.0
    %759 = vmatpush2.msra.mxu0 0.0
    %760 = vmatprep.subr.mxu0 0.0
    %761 = vmatpush2.msra.mxu0 0.0
    %762 = vmatprep.subr.mxu0 0.0
    %763 = vmatpush2.msra.mxu0 0.0
    %764 = vmatprep.subr.mxu0 0.0
    %765 = vmatpush2.msra.mxu0 0.0
    %766 = vmatprep.subr.mxu0 0.0
    %767 = vmatpush2.msra.mxu0 0.0
    %768 = vmatprep.subr.mxu0 0.0
    %769 = vmatpush2.msra.mxu0 0.0
    %770 = vmatprep.subr.mxu0 0.0
    %771 = vmatpush2.msra.mxu0 0.0
    %772 = vmatprep.subr.mxu0 0.0
    %773 = vmatpush2.msra.mxu0 0.0
    %774 = vmatprep.subr.mxu0 0.0
    %775 = vmatpush2.msra.mxu0 0.0
    %776 = vmatprep.subr.mxu0 0.0
    %777 = vmatpush2.msra.mxu0 0.0
    %778 = vmatprep.mubr.f32.mxu0 0.0
    %v779 = vand.u32 %v612, 4294901760
    %780 = vmatmul.mubr.f32.gmra.mxu0 %v779
    %v781 = vpop.f32.mrf.mxu0
    %v782 = vadd.f32 %v691, %v781
    %v783 = vpop.f32.mrf.mxu0
    %784 = vmatprep.mubr.f32.mxu0 0.0
    %v785 = vand.u32 %v615, 4294901760
    %786 = vmatmul.mubr.f32.gmra.mxu0 %v785
    %v787 = vpop.f32.mrf.mxu0
    %v788 = vadd.f32 %v701, %v787
    %v789 = vpop.f32.mrf.mxu0
    %790 = vdwg.mxu0
    %791 = vmatprep.subr.mxu0 0.0
    %792 = vmatpush1.msra.mxu0 0.0
    %793 = vmatprep.subr.mxu0 0.0
    %794 = vmatpush1.msra.mxu0 0.0
    %795 = vmatprep.subr.mxu0 0.0
    %796 = vmatpush1.msra.mxu0 0.0
    %797 = vmatprep.subr.mxu0 0.0
    %798 = vmatpush1.msra.mxu0 0.0
    %799 = vmatprep.subr.mxu0 0.0
    %800 = vmatpush1.msra.mxu0 0.0
    %801 = vmatprep.subr.mxu0 0.0
    %802 = vmatpush1.msra.mxu0 0.0
    %803 = vmatprep.subr.mxu0 0.0
    %804 = vmatpush1.msra.mxu0 0.0
    %805 = vmatprep.subr.mxu0 0.0
    %806 = vmatpush1.msra.mxu0 0.0
    %807 = vmatprep.subr.mxu0 0.0
    %808 = vmatpush1.msra.mxu0 0.0
    %809 = vmatprep.subr.mxu0 0.0
    %810 = vmatpush1.msra.mxu0 0.0
    %811 = vmatprep.subr.mxu0 0.0
    %812 = vmatpush1.msra.mxu0 0.0
    %813 = vmatprep.subr.mxu0 0.0
    %814 = vmatpush1.msra.mxu0 0.0
    %815 = vmatprep.subr.mxu0 0.0
    %816 = vmatpush1.msra.mxu0 0.0
    %817 = vmatprep.subr.mxu0 0.0
    %818 = vmatpush1.msra.mxu0 0.0
    %819 = vmatprep.subr.mxu0 0.0
    %v820 = vand.u32 %v602, 4294901760
    %v821 = vsub.f32 %v602, %v820
    %822 = vmatpush1.msra.mxu0 %v821
    %823 = vmatprep.subr.mxu0 0.0
    %v824 = vand.u32 %v601, 4294901760
    %v825 = vsub.f32 %v601, %v824
    %826 = vmatpush1.msra.mxu0 %v825
    %827 = vmatprep.subr.mxu0 0.0
    %828 = vmatpush2.msra.mxu0 0.0
    %829 = vmatprep.subr.mxu0 0.0
    %830 = vmatpush2.msra.mxu0 0.0
    %831 = vmatprep.subr.mxu0 0.0
    %832 = vmatpush2.msra.mxu0 0.0
    %833 = vmatprep.subr.mxu0 0.0
    %834 = vmatpush2.msra.mxu0 0.0
    %835 = vmatprep.subr.mxu0 0.0
    %836 = vmatpush2.msra.mxu0 0.0
    %837 = vmatprep.subr.mxu0 0.0
    %838 = vmatpush2.msra.mxu0 0.0
    %839 = vmatprep.subr.mxu0 0.0
    %840 = vmatpush2.msra.mxu0 0.0
    %841 = vmatprep.subr.mxu0 0.0
    %842 = vmatpush2.msra.mxu0 0.0
    %843 = vmatprep.subr.mxu0 0.0
    %844 = vmatpush2.msra.mxu0 0.0
    %845 = vmatprep.subr.mxu0 0.0
    %846 = vmatpush2.msra.mxu0 0.0
    %847 = vmatprep.subr.mxu0 0.0
    %848 = vmatpush2.msra.mxu0 0.0
    %849 = vmatprep.subr.mxu0 0.0
    %850 = vmatpush2.msra.mxu0 0.0
    %851 = vmatprep.subr.mxu0 0.0
    %852 = vmatpush2.msra.mxu0 0.0
    %853 = vmatprep.subr.mxu0 0.0
    %854 = vmatpush2.msra.mxu0 0.0
    %855 = vmatprep.subr.mxu0 0.0
    %856 = vmatpush2.msra.mxu0 0.0
    %857 = vmatprep.subr.mxu0 0.0
    %858 = vmatpush2.msra.mxu0 0.0
    %859 = vmatprep.mubr.f32.mxu0 0.0
    %v860 = vand.u32 %v612, 4294901760
    %v861 = vsub.f32 %v612, %v860
    %862 = vmatmul.mubr.f32.gmra.mxu0 %v861
    %v863 = vpop.f32.mrf.mxu0
    %v864 = vadd.f32 %v782, %v863
    %v865 = vpop.f32.mrf.mxu0
    %866 = vmatprep.mubr.f32.mxu0 0.0
    %v867 = vand.u32 %v615, 4294901760
    %v868 = vsub.f32 %v615, %v867
    %869 = vmatmul.mubr.f32.gmra.mxu0 %v868
    %v870 = vpop.f32.mrf.mxu0
    %v871 = vadd.f32 %v788, %v870
    %v872 = vpop.f32.mrf.mxu0
    %873 = vdwg.mxu0
    %874 = vmatprep.subr.mxu0 0.0
    %875 = vmatpush1.msra.mxu0 0.0
    %876 = vmatprep.subr.mxu0 0.0
    %877 = vmatpush1.msra.mxu0 0.0
    %878 = vmatprep.subr.mxu0 0.0
    %879 = vmatpush1.msra.mxu0 0.0
    %880 = vmatprep.subr.mxu0 0.0
    %881 = vmatpush1.msra.mxu0 0.0
    %882 = vmatprep.subr.mxu0 0.0
    %883 = vmatpush1.msra.mxu0 0.0
    %884 = vmatprep.subr.mxu0 0.0
    %885 = vmatpush1.msra.mxu0 0.0
    %886 = vmatprep.subr.mxu0 0.0
    %887 = vmatpush1.msra.mxu0 0.0
    %888 = vmatprep.subr.mxu0 0.0
    %889 = vmatpush1.msra.mxu0 0.0
    %890 = vmatprep.subr.mxu0 0.0
    %891 = vmatpush1.msra.mxu0 0.0
    %892 = vmatprep.subr.mxu0 0.0
    %893 = vmatpush1.msra.mxu0 0.0
    %894 = vmatprep.subr.mxu0 0.0
    %895 = vmatpush1.msra.mxu0 0.0
    %896 = vmatprep.subr.mxu0 0.0
    %897 = vmatpush1.msra.mxu0 0.0
    %898 = vmatprep.subr.mxu0 0.0
    %899 = vmatpush1.msra.mxu0 0.0
    %900 = vmatprep.subr.mxu0 0.0
    %901 = vmatpush1.msra.mxu0 0.0
    %902 = vmatprep.subr.mxu0 0.0
    %v903 = vand.u32 %v602, 4294901760
    %904 = vmatpush1.msra.mxu0 %v903
    %905 = vmatprep.subr.mxu0 0.0
    %v906 = vand.u32 %v601, 4294901760
    %907 = vmatpush1.msra.mxu0 %v906
    %908 = vmatprep.subr.mxu0 0.0
    %909 = vmatpush2.msra.mxu0 0.0
    %910 = vmatprep.subr.mxu0 0.0
    %911 = vmatpush2.msra.mxu0 0.0
    %912 = vmatprep.subr.mxu0 0.0
    %913 = vmatpush2.msra.mxu0 0.0
    %914 = vmatprep.subr.mxu0 0.0
    %915 = vmatpush2.msra.mxu0 0.0
    %916 = vmatprep.subr.mxu0 0.0
    %917 = vmatpush2.msra.mxu0 0.0
    %918 = vmatprep.subr.mxu0 0.0
    %919 = vmatpush2.msra.mxu0 0.0
    %920 = vmatprep.subr.mxu0 0.0
    %921 = vmatpush2.msra.mxu0 0.0
    %922 = vmatprep.subr.mxu0 0.0
    %923 = vmatpush2.msra.mxu0 0.0
    %924 = vmatprep.subr.mxu0 0.0
    %925 = vmatpush2.msra.mxu0 0.0
    %926 = vmatprep.subr.mxu0 0.0
    %927 = vmatpush2.msra.mxu0 0.0
    %928 = vmatprep.subr.mxu0 0.0
    %929 = vmatpush2.msra.mxu0 0.0
    %930 = vmatprep.subr.mxu0 0.0
    %931 = vmatpush2.msra.mxu0 0.0
    %932 = vmatprep.subr.mxu0 0.0
    %933 = vmatpush2.msra.mxu0 0.0
    %934 = vmatprep.subr.mxu0 0.0
    %935 = vmatpush2.msra.mxu0 0.0
    %936 = vmatprep.subr.mxu0 0.0
    %937 = vmatpush2.msra.mxu0 0.0
    %938 = vmatprep.subr.mxu0 0.0
    %939 = vmatpush2.msra.mxu0 0.0
    %940 = vmatprep.mubr.f32.mxu0 0.0
    %v941 = vand.u32 %v612, 4294901760
    %v942 = vsub.f32 %v612, %v941
    %v943 = vand.u32 %v942, 4294901760
    %944 = vmatmul.mubr.f32.gmra.mxu0 %v943
    %v945 = vpop.f32.mrf.mxu0
    %v946 = vadd.f32 %v864, %v945
    %v947 = vpop.f32.mrf.mxu0
    %948 = vmatprep.mubr.f32.mxu0 0.0
    %v949 = vand.u32 %v615, 4294901760
    %v950 = vsub.f32 %v615, %v949
    %v951 = vand.u32 %v950, 4294901760
    %952 = vmatmul.mubr.f32.gmra.mxu0 %v951
    %v953 = vpop.f32.mrf.mxu0
    %v954 = vadd.f32 %v871, %v953
    %v955 = vpop.f32.mrf.mxu0
    %956 = vdwg.mxu0
    %957 = vmatprep.subr.mxu0 0.0
    %958 = vmatpush1.msra.mxu0 0.0
    %959 = vmatprep.subr.mxu0 0.0
    %960 = vmatpush1.msra.mxu0 0.0
    %961 = vmatprep.subr.mxu0 0.0
    %962 = vmatpush1.msra.mxu0 0.0
    %963 = vmatprep.subr.mxu0 0.0
    %964 = vmatpush1.msra.mxu0 0.0
    %965 = vmatprep.subr.mxu0 0.0
    %966 = vmatpush1.msra.mxu0 0.0
    %967 = vmatprep.subr.mxu0 0.0
    %968 = vmatpush1.msra.mxu0 0.0
    %969 = vmatprep.subr.mxu0 0.0
    %970 = vmatpush1.msra.mxu0 0.0
    %971 = vmatprep.subr.mxu0 0.0
    %972 = vmatpush1.msra.mxu0 0.0
    %973 = vmatprep.subr.mxu0 0.0
    %974 = vmatpush1.msra.mxu0 0.0
    %975 = vmatprep.subr.mxu0 0.0
    %976 = vmatpush1.msra.mxu0 0.0
    %977 = vmatprep.subr.mxu0 0.0
    %978 = vmatpush1.msra.mxu0 0.0
    %979 = vmatprep.subr.mxu0 0.0
    %980 = vmatpush1.msra.mxu0 0.0
    %981 = vmatprep.subr.mxu0 0.0
    %982 = vmatpush1.msra.mxu0 0.0
    %983 = vmatprep.subr.mxu0 0.0
    %984 = vmatpush1.msra.mxu0 0.0
    %985 = vmatprep.subr.mxu0 0.0
    %v986 = vand.u32 %v602, 4294901760
    %v987 = vsub.f32 %v602, %v986
    %v988 = vand.u32 %v987, 4294901760
    %989 = vmatpush1.msra.mxu0 %v988
    %990 = vmatprep.subr.mxu0 0.0
    %v991 = vand.u32 %v601, 4294901760
    %v992 = vsub.f32 %v601, %v991
    %v993 = vand.u32 %v992, 4294901760
    %994 = vmatpush1.msra.mxu0 %v993
    %995 = vmatprep.subr.mxu0 0.0
    %996 = vmatpush2.msra.mxu0 0.0
    %997 = vmatprep.subr.mxu0 0.0
    %998 = vmatpush2.msra.mxu0 0.0
    %999 = vmatprep.subr.mxu0 0.0
    %1000 = vmatpush2.msra.mxu0 0.0
    %1001 = vmatprep.subr.mxu0 0.0
    %1002 = vmatpush2.msra.mxu0 0.0
    %1003 = vmatprep.subr.mxu0 0.0
    %1004 = vmatpush2.msra.mxu0 0.0
    %1005 = vmatprep.subr.mxu0 0.0
    %1006 = vmatpush2.msra.mxu0 0.0
    %1007 = vmatprep.subr.mxu0 0.0
    %1008 = vmatpush2.msra.mxu0 0.0
    %1009 = vmatprep.subr.mxu0 0.0
    %1010 = vmatpush2.msra.mxu0 0.0
    %1011 = vmatprep.subr.mxu0 0.0
    %1012 = vmatpush2.msra.mxu0 0.0
    %1013 = vmatprep.subr.mxu0 0.0
    %1014 = vmatpush2.msra.mxu0 0.0
    %1015 = vmatprep.subr.mxu0 0.0
    %1016 = vmatpush2.msra.mxu0 0.0
    %1017 = vmatprep.subr.mxu0 0.0
    %1018 = vmatpush2.msra.mxu0 0.0
    %1019 = vmatprep.subr.mxu0 0.0
    %1020 = vmatpush2.msra.mxu0 0.0
    %1021 = vmatprep.subr.mxu0 0.0
    %1022 = vmatpush2.msra.mxu0 0.0
    %1023 = vmatprep.subr.mxu0 0.0
    %1024 = vmatpush2.msra.mxu0 0.0
    %1025 = vmatprep.subr.mxu0 0.0
    %1026 = vmatpush2.msra.mxu0 0.0
    %1027 = vmatprep.mubr.f32.mxu0 0.0
    %v1028 = vand.u32 %v612, 4294901760
    %1029 = vmatmul.mubr.f32.gmra.mxu0 %v1028
    %v1030 = vpop.f32.mrf.mxu0
    %v1031 = vadd.f32 %v946, %v1030
    %v1032 = vpop.f32.mrf.mxu0
    %1033 = vmatprep.mubr.f32.mxu0 0.0
    %v1034 = vand.u32 %v615, 4294901760
    %1035 = vmatmul.mubr.f32.gmra.mxu0 %v1034
    %v1036 = vpop.f32.mrf.mxu0
    %v1037 = vadd.f32 %v954, %v1036
    %v1038 = vpop.f32.mrf.mxu0
    %1039 = vdwg.mxu0
    %1040 = vmatprep.subr.mxu0 0.0
    %1041 = vmatpush1.msra.mxu0 0.0
    %1042 = vmatprep.subr.mxu0 0.0
    %1043 = vmatpush1.msra.mxu0 0.0
    %1044 = vmatprep.subr.mxu0 0.0
    %1045 = vmatpush1.msra.mxu0 0.0
    %1046 = vmatprep.subr.mxu0 0.0
    %1047 = vmatpush1.msra.mxu0 0.0
    %1048 = vmatprep.subr.mxu0 0.0
    %1049 = vmatpush1.msra.mxu0 0.0
    %1050 = vmatprep.subr.mxu0 0.0
    %1051 = vmatpush1.msra.mxu0 0.0
    %1052 = vmatprep.subr.mxu0 0.0
    %1053 = vmatpush1.msra.mxu0 0.0
    %1054 = vmatprep.subr.mxu0 0.0
    %1055 = vmatpush1.msra.mxu0 0.0
    %1056 = vmatprep.subr.mxu0 0.0
    %1057 = vmatpush1.msra.mxu0 0.0
    %1058 = vmatprep.subr.mxu0 0.0
    %1059 = vmatpush1.msra.mxu0 0.0
    %1060 = vmatprep.subr.mxu0 0.0
    %1061 = vmatpush1.msra.mxu0 0.0
    %1062 = vmatprep.subr.mxu0 0.0
    %1063 = vmatpush1.msra.mxu0 0.0
    %1064 = vmatprep.subr.mxu0 0.0
    %1065 = vmatpush1.msra.mxu0 0.0
    %1066 = vmatprep.subr.mxu0 0.0
    %1067 = vmatpush1.msra.mxu0 0.0
    %1068 = vmatprep.subr.mxu0 0.0
    %v1069 = vand.u32 %v602, 4294901760
    %1070 = vmatpush1.msra.mxu0 %v1069
    %1071 = vmatprep.subr.mxu0 0.0
    %v1072 = vand.u32 %v601, 4294901760
    %1073 = vmatpush1.msra.mxu0 %v1072
    %1074 = vmatprep.subr.mxu0 0.0
    %1075 = vmatpush2.msra.mxu0 0.0
    %1076 = vmatprep.subr.mxu0 0.0
    %1077 = vmatpush2.msra.mxu0 0.0
    %1078 = vmatprep.subr.mxu0 0.0
    %1079 = vmatpush2.msra.mxu0 0.0
    %1080 = vmatprep.subr.mxu0 0.0
    %1081 = vmatpush2.msra.mxu0 0.0
    %1082 = vmatprep.subr.mxu0 0.0
    %1083 = vmatpush2.msra.mxu0 0.0
    %1084 = vmatprep.subr.mxu0 0.0
    %1085 = vmatpush2.msra.mxu0 0.0
    %1086 = vmatprep.subr.mxu0 0.0
    %1087 = vmatpush2.msra.mxu0 0.0
    %1088 = vmatprep.subr.mxu0 0.0
    %1089 = vmatpush2.msra.mxu0 0.0
    %1090 = vmatprep.subr.mxu0 0.0
    %1091 = vmatpush2.msra.mxu0 0.0
    %1092 = vmatprep.subr.mxu0 0.0
    %1093 = vmatpush2.msra.mxu0 0.0
    %1094 = vmatprep.subr.mxu0 0.0
    %1095 = vmatpush2.msra.mxu0 0.0
    %1096 = vmatprep.subr.mxu0 0.0
    %1097 = vmatpush2.msra.mxu0 0.0
    %1098 = vmatprep.subr.mxu0 0.0
    %1099 = vmatpush2.msra.mxu0 0.0
    %1100 = vmatprep.subr.mxu0 0.0
    %1101 = vmatpush2.msra.mxu0 0.0
    %1102 = vmatprep.subr.mxu0 0.0
    %1103 = vmatpush2.msra.mxu0 0.0
    %1104 = vmatprep.subr.mxu0 0.0
    %1105 = vmatpush2.msra.mxu0 0.0
    %1106 = vmatprep.mubr.f32.mxu0 0.0
    %v1107 = vand.u32 %v612, 4294901760
    %1108 = vmatmul.mubr.f32.gmra.mxu0 %v1107
    %v1109 = vpop.f32.mrf.mxu0
    %v1110 = vadd.f32 %v1031, %v1109
    %v1111 = vpop.f32.mrf.mxu0
    %1112 = vmatprep.mubr.f32.mxu0 0.0
    %v1113 = vand.u32 %v615, 4294901760
    %1114 = vmatmul.mubr.f32.gmra.mxu0 %v1113
    %v1115 = vpop.f32.mrf.mxu0
    %v1116 = vadd.f32 %v1037, %v1115
    %v1117 = vpop.f32.mrf.mxu0
    %1118 = vdwg.mxu0
    %s1119 = scalar_lea.vmem [#allocation8], 32
    %v1120 = vld [vmem:[%s1119] sm:$0xff]
    %v1121 = vld [vmem:[%s1119 + $0x8] sm:$0xff]
    %s1122 = scalar_lea.vmem %s4, 2
    %v1123 = vld [vmem:[%s1122] sm:$0x1]
    %v1125 = vlaneseq
    %v1126 = vshrl.u32 %v1125, 7
    %v1127 = vsub.s32 0, %v1126
    %v1128 = vrot.slane %v1123, %v1127
    %v1131 = vsel %vm91, %v80, 0
    %v1134 = vsel %vm91, %v81, 0
    %1136 = vmatprep.subr.mxu0 0.0
    %1137 = vmatpush1.msra.mxu0 0.0
    %1138 = vmatprep.subr.mxu0 0.0
    %1139 = vmatpush1.msra.mxu0 0.0
    %1140 = vmatprep.subr.mxu0 0.0
    %1141 = vmatpush1.msra.mxu0 0.0
    %1142 = vmatprep.subr.mxu0 0.0
    %1143 = vmatpush1.msra.mxu0 0.0
    %1144 = vmatprep.subr.mxu0 0.0
    %1145 = vmatpush1.msra.mxu0 0.0
    %1146 = vmatprep.subr.mxu0 0.0
    %1147 = vmatpush1.msra.mxu0 0.0
    %1148 = vmatprep.subr.mxu0 0.0
    %1149 = vmatpush1.msra.mxu0 0.0
    %1150 = vmatprep.subr.mxu0 0.0
    %1151 = vmatpush1.msra.mxu0 0.0
    %1152 = vmatprep.subr.mxu0 0.0
    %1153 = vmatpush1.msra.mxu0 0.0
    %1154 = vmatprep.subr.mxu0 0.0
    %1155 = vmatpush1.msra.mxu0 0.0
    %1156 = vmatprep.subr.mxu0 0.0
    %1157 = vmatpush1.msra.mxu0 0.0
    %1158 = vmatprep.subr.mxu0 0.0
    %1159 = vmatpush1.msra.mxu0 0.0
    %1160 = vmatprep.subr.mxu0 0.0
    %1161 = vmatpush1.msra.mxu0 0.0
    %1162 = vmatprep.subr.mxu0 0.0
    %1163 = vmatpush1.msra.mxu0 0.0
    %1164 = vmatprep.subr.mxu0 0.0
    %v1165 = vand.u32 %v1121, 4294901760
    %1166 = vmatpush1.msra.mxu0 %v1165
    %1167 = vmatprep.subr.mxu0 0.0
    %v1168 = vand.u32 %v1120, 4294901760
    %1169 = vmatpush1.msra.mxu0 %v1168
    %1170 = vmatprep.subr.mxu0 0.0
    %1171 = vmatpush2.msra.mxu0 0.0
    %1172 = vmatprep.subr.mxu0 0.0
    %1173 = vmatpush2.msra.mxu0 0.0
    %1174 = vmatprep.subr.mxu0 0.0
    %1175 = vmatpush2.msra.mxu0 0.0
    %1176 = vmatprep.subr.mxu0 0.0
    %1177 = vmatpush2.msra.mxu0 0.0
    %1178 = vmatprep.subr.mxu0 0.0
    %1179 = vmatpush2.msra.mxu0 0.0
    %1180 = vmatprep.subr.mxu0 0.0
    %1181 = vmatpush2.msra.mxu0 0.0
    %1182 = vmatprep.subr.mxu0 0.0
    %1183 = vmatpush2.msra.mxu0 0.0
    %1184 = vmatprep.subr.mxu0 0.0
    %1185 = vmatpush2.msra.mxu0 0.0
    %1186 = vmatprep.subr.mxu0 0.0
    %1187 = vmatpush2.msra.mxu0 0.0
    %1188 = vmatprep.subr.mxu0 0.0
    %1189 = vmatpush2.msra.mxu0 0.0
    %1190 = vmatprep.subr.mxu0 0.0
    %1191 = vmatpush2.msra.mxu0 0.0
    %1192 = vmatprep.subr.mxu0 0.0
    %1193 = vmatpush2.msra.mxu0 0.0
    %1194 = vmatprep.subr.mxu0 0.0
    %1195 = vmatpush2.msra.mxu0 0.0
    %1196 = vmatprep.subr.mxu0 0.0
    %1197 = vmatpush2.msra.mxu0 0.0
    %1198 = vmatprep.subr.mxu0 0.0
    %1199 = vmatpush2.msra.mxu0 0.0
    %1200 = vmatprep.subr.mxu0 0.0
    %1201 = vmatpush2.msra.mxu0 0.0
    %1202 = vmatprep.mubr.f32.mxu0 0.0
    %v1203 = vand.u32 %v1131, 4294901760
    %v1204 = vsub.f32 %v1131, %v1203
    %v1205 = vand.u32 %v1204, 4294901760
    %v1206 = vsub.f32 %v1204, %v1205
    %v1207 = vand.u32 %v1206, 4294901760
    %1208 = vmatmul.mubr.f32.gmra.mxu0 %v1207
    %v1209 = vpop.f32.mrf.mxu0
    %v1210 = vadd.f32 %v1128, %v1209
    %v1211 = vpop.f32.mrf.mxu0
    %1212 = vmatprep.mubr.f32.mxu0 0.0
    %v1213 = vand.u32 %v1134, 4294901760
    %v1214 = vsub.f32 %v1134, %v1213
    %v1215 = vand.u32 %v1214, 4294901760
    %v1216 = vsub.f32 %v1214, %v1215
    %v1217 = vand.u32 %v1216, 4294901760
    %1218 = vmatmul.mubr.f32.gmra.mxu0 %v1217
    %v1219 = vpop.f32.mrf.mxu0
    %v1220 = vadd.f32 %v1128, %v1219
    %v1221 = vpop.f32.mrf.mxu0
    %1222 = vdwg.mxu0
    %1223 = vmatprep.subr.mxu0 0.0
    %1224 = vmatpush1.msra.mxu0 0.0
    %1225 = vmatprep.subr.mxu0 0.0
    %1226 = vmatpush1.msra.mxu0 0.0
    %1227 = vmatprep.subr.mxu0 0.0
    %1228 = vmatpush1.msra.mxu0 0.0
    %1229 = vmatprep.subr.mxu0 0.0
    %1230 = vmatpush1.msra.mxu0 0.0
    %1231 = vmatprep.subr.mxu0 0.0
    %1232 = vmatpush1.msra.mxu0 0.0
    %1233 = vmatprep.subr.mxu0 0.0
    %1234 = vmatpush1.msra.mxu0 0.0
    %1235 = vmatprep.subr.mxu0 0.0
    %1236 = vmatpush1.msra.mxu0 0.0
    %1237 = vmatprep.subr.mxu0 0.0
    %1238 = vmatpush1.msra.mxu0 0.0
    %1239 = vmatprep.subr.mxu0 0.0
    %1240 = vmatpush1.msra.mxu0 0.0
    %1241 = vmatprep.subr.mxu0 0.0
    %1242 = vmatpush1.msra.mxu0 0.0
    %1243 = vmatprep.subr.mxu0 0.0
    %1244 = vmatpush1.msra.mxu0 0.0
    %1245 = vmatprep.subr.mxu0 0.0
    %1246 = vmatpush1.msra.mxu0 0.0
    %1247 = vmatprep.subr.mxu0 0.0
    %1248 = vmatpush1.msra.mxu0 0.0
    %1249 = vmatprep.subr.mxu0 0.0
    %1250 = vmatpush1.msra.mxu0 0.0
    %1251 = vmatprep.subr.mxu0 0.0
    %v1252 = vand.u32 %v1121, 4294901760
    %v1253 = vsub.f32 %v1121, %v1252
    %v1254 = vand.u32 %v1253, 4294901760
    %v1255 = vsub.f32 %v1253, %v1254
    %v1256 = vand.u32 %v1255, 4294901760
    %1257 = vmatpush1.msra.mxu0 %v1256
    %1258 = vmatprep.subr.mxu0 0.0
    %v1259 = vand.u32 %v1120, 4294901760
    %v1260 = vsub.f32 %v1120, %v1259
    %v1261 = vand.u32 %v1260, 4294901760
    %v1262 = vsub.f32 %v1260, %v1261
    %v1263 = vand.u32 %v1262, 4294901760
    %1264 = vmatpush1.msra.mxu0 %v1263
    %1265 = vmatprep.subr.mxu0 0.0
    %1266 = vmatpush2.msra.mxu0 0.0
    %1267 = vmatprep.subr.mxu0 0.0
    %1268 = vmatpush2.msra.mxu0 0.0
    %1269 = vmatprep.subr.mxu0 0.0
    %1270 = vmatpush2.msra.mxu0 0.0
    %1271 = vmatprep.subr.mxu0 0.0
    %1272 = vmatpush2.msra.mxu0 0.0
    %1273 = vmatprep.subr.mxu0 0.0
    %1274 = vmatpush2.msra.mxu0 0.0
    %1275 = vmatprep.subr.mxu0 0.0
    %1276 = vmatpush2.msra.mxu0 0.0
    %1277 = vmatprep.subr.mxu0 0.0
    %1278 = vmatpush2.msra.mxu0 0.0
    %1279 = vmatprep.subr.mxu0 0.0
    %1280 = vmatpush2.msra.mxu0 0.0
    %1281 = vmatprep.subr.mxu0 0.0
    %1282 = vmatpush2.msra.mxu0 0.0
    %1283 = vmatprep.subr.mxu0 0.0
    %1284 = vmatpush2.msra.mxu0 0.0
    %1285 = vmatprep.subr.mxu0 0.0
    %1286 = vmatpush2.msra.mxu0 0.0
    %1287 = vmatprep.subr.mxu0 0.0
    %1288 = vmatpush2.msra.mxu0 0.0
    %1289 = vmatprep.subr.mxu0 0.0
    %1290 = vmatpush2.msra.mxu0 0.0
    %1291 = vmatprep.subr.mxu0 0.0
    %1292 = vmatpush2.msra.mxu0 0.0
    %1293 = vmatprep.subr.mxu0 0.0
    %1294 = vmatpush2.msra.mxu0 0.0
    %1295 = vmatprep.subr.mxu0 0.0
    %1296 = vmatpush2.msra.mxu0 0.0
    %1297 = vmatprep.mubr.f32.mxu0 0.0
    %v1298 = vand.u32 %v1131, 4294901760
    %1299 = vmatmul.mubr.f32.gmra.mxu0 %v1298
    %v1300 = vpop.f32.mrf.mxu0
    %v1301 = vadd.f32 %v1210, %v1300
    %v1302 = vpop.f32.mrf.mxu0
    %1303 = vmatprep.mubr.f32.mxu0 0.0
    %v1304 = vand.u32 %v1134, 4294901760
    %1305 = vmatmul.mubr.f32.gmra.mxu0 %v1304
    %v1306 = vpop.f32.mrf.mxu0
    %v1307 = vadd.f32 %v1220, %v1306
    %v1308 = vpop.f32.mrf.mxu0
    %1309 = vdwg.mxu0
    %1310 = vmatprep.subr.mxu0 0.0
    %1311 = vmatpush1.msra.mxu0 0.0
    %1312 = vmatprep.subr.mxu0 0.0
    %1313 = vmatpush1.msra.mxu0 0.0
    %1314 = vmatprep.subr.mxu0 0.0
    %1315 = vmatpush1.msra.mxu0 0.0
    %1316 = vmatprep.subr.mxu0 0.0
    %1317 = vmatpush1.msra.mxu0 0.0
    %1318 = vmatprep.subr.mxu0 0.0
    %1319 = vmatpush1.msra.mxu0 0.0
    %1320 = vmatprep.subr.mxu0 0.0
    %1321 = vmatpush1.msra.mxu0 0.0
    %1322 = vmatprep.subr.mxu0 0.0
    %1323 = vmatpush1.msra.mxu0 0.0
    %1324 = vmatprep.subr.mxu0 0.0
    %1325 = vmatpush1.msra.mxu0 0.0
    %1326 = vmatprep.subr.mxu0 0.0
    %1327 = vmatpush1.msra.mxu0 0.0
    %1328 = vmatprep.subr.mxu0 0.0
    %1329 = vmatpush1.msra.mxu0 0.0
    %1330 = vmatprep.subr.mxu0 0.0
    %1331 = vmatpush1.msra.mxu0 0.0
    %1332 = vmatprep.subr.mxu0 0.0
    %1333 = vmatpush1.msra.mxu0 0.0
    %1334 = vmatprep.subr.mxu0 0.0
    %1335 = vmatpush1.msra.mxu0 0.0
    %1336 = vmatprep.subr.mxu0 0.0
    %1337 = vmatpush1.msra.mxu0 0.0
    %1338 = vmatprep.subr.mxu0 0.0
    %v1339 = vand.u32 %v1121, 4294901760
    %v1340 = vsub.f32 %v1121, %v1339
    %1341 = vmatpush1.msra.mxu0 %v1340
    %1342 = vmatprep.subr.mxu0 0.0
    %v1343 = vand.u32 %v1120, 4294901760
    %v1344 = vsub.f32 %v1120, %v1343
    %1345 = vmatpush1.msra.mxu0 %v1344
    %1346 = vmatprep.subr.mxu0 0.0
    %1347 = vmatpush2.msra.mxu0 0.0
    %1348 = vmatprep.subr.mxu0 0.0
    %1349 = vmatpush2.msra.mxu0 0.0
    %1350 = vmatprep.subr.mxu0 0.0
    %1351 = vmatpush2.msra.mxu0 0.0
    %1352 = vmatprep.subr.mxu0 0.0
    %1353 = vmatpush2.msra.mxu0 0.0
    %1354 = vmatprep.subr.mxu0 0.0
    %1355 = vmatpush2.msra.mxu0 0.0
    %1356 = vmatprep.subr.mxu0 0.0
    %1357 = vmatpush2.msra.mxu0 0.0
    %1358 = vmatprep.subr.mxu0 0.0
    %1359 = vmatpush2.msra.mxu0 0.0
    %1360 = vmatprep.subr.mxu0 0.0
    %1361 = vmatpush2.msra.mxu0 0.0
    %1362 = vmatprep.subr.mxu0 0.0
    %1363 = vmatpush2.msra.mxu0 0.0
    %1364 = vmatprep.subr.mxu0 0.0
    %1365 = vmatpush2.msra.mxu0 0.0
    %1366 = vmatprep.subr.mxu0 0.0
    %1367 = vmatpush2.msra.mxu0 0.0
    %1368 = vmatprep.subr.mxu0 0.0
    %1369 = vmatpush2.msra.mxu0 0.0
    %1370 = vmatprep.subr.mxu0 0.0
    %1371 = vmatpush2.msra.mxu0 0.0
    %1372 = vmatprep.subr.mxu0 0.0
    %1373 = vmatpush2.msra.mxu0 0.0
    %1374 = vmatprep.subr.mxu0 0.0
    %1375 = vmatpush2.msra.mxu0 0.0
    %1376 = vmatprep.subr.mxu0 0.0
    %1377 = vmatpush2.msra.mxu0 0.0
    %1378 = vmatprep.mubr.f32.mxu0 0.0
    %v1379 = vand.u32 %v1131, 4294901760
    %v1380 = vsub.f32 %v1131, %v1379
    %1381 = vmatmul.mubr.f32.gmra.mxu0 %v1380
    %v1382 = vpop.f32.mrf.mxu0
    %v1383 = vadd.f32 %v1301, %v1382
    %v1384 = vpop.f32.mrf.mxu0
    %1385 = vmatprep.mubr.f32.mxu0 0.0
    %v1386 = vand.u32 %v1134, 4294901760
    %v1387 = vsub.f32 %v1134, %v1386
    %1388 = vmatmul.mubr.f32.gmra.mxu0 %v1387
    %v1389 = vpop.f32.mrf.mxu0
    %v1390 = vadd.f32 %v1307, %v1389
    %v1391 = vpop.f32.mrf.mxu0
    %1392 = vdwg.mxu0
    %1393 = vmatprep.subr.mxu0 0.0
    %1394 = vmatpush1.msra.mxu0 0.0
    %1395 = vmatprep.subr.mxu0 0.0
    %1396 = vmatpush1.msra.mxu0 0.0
    %1397 = vmatprep.subr.mxu0 0.0
    %1398 = vmatpush1.msra.mxu0 0.0
    %1399 = vmatprep.subr.mxu0 0.0
    %1400 = vmatpush1.msra.mxu0 0.0
    %1401 = vmatprep.subr.mxu0 0.0
    %1402 = vmatpush1.msra.mxu0 0.0
    %1403 = vmatprep.subr.mxu0 0.0
    %1404 = vmatpush1.msra.mxu0 0.0
    %1405 = vmatprep.subr.mxu0 0.0
    %1406 = vmatpush1.msra.mxu0 0.0
    %1407 = vmatprep.subr.mxu0 0.0
    %1408 = vmatpush1.msra.mxu0 0.0
    %1409 = vmatprep.subr.mxu0 0.0
    %1410 = vmatpush1.msra.mxu0 0.0
    %1411 = vmatprep.subr.mxu0 0.0
    %1412 = vmatpush1.msra.mxu0 0.0
    %1413 = vmatprep.subr.mxu0 0.0
    %1414 = vmatpush1.msra.mxu0 0.0
    %1415 = vmatprep.subr.mxu0 0.0
    %1416 = vmatpush1.msra.mxu0 0.0
    %1417 = vmatprep.subr.mxu0 0.0
    %1418 = vmatpush1.msra.mxu0 0.0
    %1419 = vmatprep.subr.mxu0 0.0
    %1420 = vmatpush1.msra.mxu0 0.0
    %1421 = vmatprep.subr.mxu0 0.0
    %v1422 = vand.u32 %v1121, 4294901760
    %1423 = vmatpush1.msra.mxu0 %v1422
    %1424 = vmatprep.subr.mxu0 0.0
    %v1425 = vand.u32 %v1120, 4294901760
    %1426 = vmatpush1.msra.mxu0 %v1425
    %1427 = vmatprep.subr.mxu0 0.0
    %1428 = vmatpush2.msra.mxu0 0.0
    %1429 = vmatprep.subr.mxu0 0.0
    %1430 = vmatpush2.msra.mxu0 0.0
    %1431 = vmatprep.subr.mxu0 0.0
    %1432 = vmatpush2.msra.mxu0 0.0
    %1433 = vmatprep.subr.mxu0 0.0
    %1434 = vmatpush2.msra.mxu0 0.0
    %1435 = vmatprep.subr.mxu0 0.0
    %1436 = vmatpush2.msra.mxu0 0.0
    %1437 = vmatprep.subr.mxu0 0.0
    %1438 = vmatpush2.msra.mxu0 0.0
    %1439 = vmatprep.subr.mxu0 0.0
    %1440 = vmatpush2.msra.mxu0 0.0
    %1441 = vmatprep.subr.mxu0 0.0
    %1442 = vmatpush2.msra.mxu0 0.0
    %1443 = vmatprep.subr.mxu0 0.0
    %1444 = vmatpush2.msra.mxu0 0.0
    %1445 = vmatprep.subr.mxu0 0.0
    %1446 = vmatpush2.msra.mxu0 0.0
    %1447 = vmatprep.subr.mxu0 0.0
    %1448 = vmatpush2.msra.mxu0 0.0
    %1449 = vmatprep.subr.mxu0 0.0
    %1450 = vmatpush2.msra.mxu0 0.0
    %1451 = vmatprep.subr.mxu0 0.0
    %1452 = vmatpush2.msra.mxu0 0.0
    %1453 = vmatprep.subr.mxu0 0.0
    %1454 = vmatpush2.msra.mxu0 0.0
    %1455 = vmatprep.subr.mxu0 0.0
    %1456 = vmatpush2.msra.mxu0 0.0
    %1457 = vmatprep.subr.mxu0 0.0
    %1458 = vmatpush2.msra.mxu0 0.0
    %1459 = vmatprep.mubr.f32.mxu0 0.0
    %v1460 = vand.u32 %v1131, 4294901760
    %v1461 = vsub.f32 %v1131, %v1460
    %v1462 = vand.u32 %v1461, 4294901760
    %1463 = vmatmul.mubr.f32.gmra.mxu0 %v1462
    %v1464 = vpop.f32.mrf.mxu0
    %v1465 = vadd.f32 %v1383, %v1464
    %v1466 = vpop.f32.mrf.mxu0
    %1467 = vmatprep.mubr.f32.mxu0 0.0
    %v1468 = vand.u32 %v1134, 4294901760
    %v1469 = vsub.f32 %v1134, %v1468
    %v1470 = vand.u32 %v1469, 4294901760
    %1471 = vmatmul.mubr.f32.gmra.mxu0 %v1470
    %v1472 = vpop.f32.mrf.mxu0
    %v1473 = vadd.f32 %v1390, %v1472
    %v1474 = vpop.f32.mrf.mxu0
    %1475 = vdwg.mxu0
    %1476 = vmatprep.subr.mxu0 0.0
    %1477 = vmatpush1.msra.mxu0 0.0
    %1478 = vmatprep.subr.mxu0 0.0
    %1479 = vmatpush1.msra.mxu0 0.0
    %1480 = vmatprep.subr.mxu0 0.0
    %1481 = vmatpush1.msra.mxu0 0.0
    %1482 = vmatprep.subr.mxu0 0.0
    %1483 = vmatpush1.msra.mxu0 0.0
    %1484 = vmatprep.subr.mxu0 0.0
    %1485 = vmatpush1.msra.mxu0 0.0
    %1486 = vmatprep.subr.mxu0 0.0
    %1487 = vmatpush1.msra.mxu0 0.0
    %1488 = vmatprep.subr.mxu0 0.0
    %1489 = vmatpush1.msra.mxu0 0.0
    %1490 = vmatprep.subr.mxu0 0.0
    %1491 = vmatpush1.msra.mxu0 0.0
    %1492 = vmatprep.subr.mxu0 0.0
    %1493 = vmatpush1.msra.mxu0 0.0
    %1494 = vmatprep.subr.mxu0 0.0
    %1495 = vmatpush1.msra.mxu0 0.0
    %1496 = vmatprep.subr.mxu0 0.0
    %1497 = vmatpush1.msra.mxu0 0.0
    %1498 = vmatprep.subr.mxu0 0.0
    %1499 = vmatpush1.msra.mxu0 0.0
    %1500 = vmatprep.subr.mxu0 0.0
    %1501 = vmatpush1.msra.mxu0 0.0
    %1502 = vmatprep.subr.mxu0 0.0
    %1503 = vmatpush1.msra.mxu0 0.0
    %1504 = vmatprep.subr.mxu0 0.0
    %v1505 = vand.u32 %v1121, 4294901760
    %v1506 = vsub.f32 %v1121, %v1505
    %v1507 = vand.u32 %v1506, 4294901760
    %1508 = vmatpush1.msra.mxu0 %v1507
    %1509 = vmatprep.subr.mxu0 0.0
    %v1510 = vand.u32 %v1120, 4294901760
    %v1511 = vsub.f32 %v1120, %v1510
    %v1512 = vand.u32 %v1511, 4294901760
    %1513 = vmatpush1.msra.mxu0 %v1512
    %1514 = vmatprep.subr.mxu0 0.0
    %1515 = vmatpush2.msra.mxu0 0.0
    %1516 = vmatprep.subr.mxu0 0.0
    %1517 = vmatpush2.msra.mxu0 0.0
    %1518 = vmatprep.subr.mxu0 0.0
    %1519 = vmatpush2.msra.mxu0 0.0
    %1520 = vmatprep.subr.mxu0 0.0
    %1521 = vmatpush2.msra.mxu0 0.0
    %1522 = vmatprep.subr.mxu0 0.0
    %1523 = vmatpush2.msra.mxu0 0.0
    %1524 = vmatprep.subr.mxu0 0.0
    %1525 = vmatpush2.msra.mxu0 0.0
    %1526 = vmatprep.subr.mxu0 0.0
    %1527 = vmatpush2.msra.mxu0 0.0
    %1528 = vmatprep.subr.mxu0 0.0
    %1529 = vmatpush2.msra.mxu0 0.0
    %1530 = vmatprep.subr.mxu0 0.0
    %1531 = vmatpush2.msra.mxu0 0.0
    %1532 = vmatprep.subr.mxu0 0.0
    %1533 = vmatpush2.msra.mxu0 0.0
    %1534 = vmatprep.subr.mxu0 0.0
    %1535 = vmatpush2.msra.mxu0 0.0
    %1536 = vmatprep.subr.mxu0 0.0
    %1537 = vmatpush2.msra.mxu0 0.0
    %1538 = vmatprep.subr.mxu0 0.0
    %1539 = vmatpush2.msra.mxu0 0.0
    %1540 = vmatprep.subr.mxu0 0.0
    %1541 = vmatpush2.msra.mxu0 0.0
    %1542 = vmatprep.subr.mxu0 0.0
    %1543 = vmatpush2.msra.mxu0 0.0
    %1544 = vmatprep.subr.mxu0 0.0
    %1545 = vmatpush2.msra.mxu0 0.0
    %1546 = vmatprep.mubr.f32.mxu0 0.0
    %v1547 = vand.u32 %v1131, 4294901760
    %1548 = vmatmul.mubr.f32.gmra.mxu0 %v1547
    %v1549 = vpop.f32.mrf.mxu0
    %v1550 = vadd.f32 %v1465, %v1549
    %v1551 = vpop.f32.mrf.mxu0
    %1552 = vmatprep.mubr.f32.mxu0 0.0
    %v1553 = vand.u32 %v1134, 4294901760
    %1554 = vmatmul.mubr.f32.gmra.mxu0 %v1553
    %v1555 = vpop.f32.mrf.mxu0
    %v1556 = vadd.f32 %v1473, %v1555
    %v1557 = vpop.f32.mrf.mxu0
    %1558 = vdwg.mxu0
    %1559 = vmatprep.subr.mxu0 0.0
    %1560 = vmatpush1.msra.mxu0 0.0
    %1561 = vmatprep.subr.mxu0 0.0
    %1562 = vmatpush1.msra.mxu0 0.0
    %1563 = vmatprep.subr.mxu0 0.0
    %1564 = vmatpush1.msra.mxu0 0.0
    %1565 = vmatprep.subr.mxu0 0.0
    %1566 = vmatpush1.msra.mxu0 0.0
    %1567 = vmatprep.subr.mxu0 0.0
    %1568 = vmatpush1.msra.mxu0 0.0
    %1569 = vmatprep.subr.mxu0 0.0
    %1570 = vmatpush1.msra.mxu0 0.0
    %1571 = vmatprep.subr.mxu0 0.0
    %1572 = vmatpush1.msra.mxu0 0.0
    %1573 = vmatprep.subr.mxu0 0.0
    %1574 = vmatpush1.msra.mxu0 0.0
    %1575 = vmatprep.subr.mxu0 0.0
    %1576 = vmatpush1.msra.mxu0 0.0
    %1577 = vmatprep.subr.mxu0 0.0
    %1578 = vmatpush1.msra.mxu0 0.0
    %1579 = vmatprep.subr.mxu0 0.0
    %1580 = vmatpush1.msra.mxu0 0.0
    %1581 = vmatprep.subr.mxu0 0.0
    %1582 = vmatpush1.msra.mxu0 0.0
    %1583 = vmatprep.subr.mxu0 0.0
    %1584 = vmatpush1.msra.mxu0 0.0
    %1585 = vmatprep.subr.mxu0 0.0
    %1586 = vmatpush1.msra.mxu0 0.0
    %1587 = vmatprep.subr.mxu0 0.0
    %v1588 = vand.u32 %v1121, 4294901760
    %1589 = vmatpush1.msra.mxu0 %v1588
    %1590 = vmatprep.subr.mxu0 0.0
    %v1591 = vand.u32 %v1120, 4294901760
    %1592 = vmatpush1.msra.mxu0 %v1591
    %1593 = vmatprep.subr.mxu0 0.0
    %1594 = vmatpush2.msra.mxu0 0.0
    %1595 = vmatprep.subr.mxu0 0.0
    %1596 = vmatpush2.msra.mxu0 0.0
    %1597 = vmatprep.subr.mxu0 0.0
    %1598 = vmatpush2.msra.mxu0 0.0
    %1599 = vmatprep.subr.mxu0 0.0
    %1600 = vmatpush2.msra.mxu0 0.0
    %1601 = vmatprep.subr.mxu0 0.0
    %1602 = vmatpush2.msra.mxu0 0.0
    %1603 = vmatprep.subr.mxu0 0.0
    %1604 = vmatpush2.msra.mxu0 0.0
    %1605 = vmatprep.subr.mxu0 0.0
    %1606 = vmatpush2.msra.mxu0 0.0
    %1607 = vmatprep.subr.mxu0 0.0
    %1608 = vmatpush2.msra.mxu0 0.0
    %1609 = vmatprep.subr.mxu0 0.0
    %1610 = vmatpush2.msra.mxu0 0.0
    %1611 = vmatprep.subr.mxu0 0.0
    %1612 = vmatpush2.msra.mxu0 0.0
    %1613 = vmatprep.subr.mxu0 0.0
    %1614 = vmatpush2.msra.mxu0 0.0
    %1615 = vmatprep.subr.mxu0 0.0
    %1616 = vmatpush2.msra.mxu0 0.0
    %1617 = vmatprep.subr.mxu0 0.0
    %1618 = vmatpush2.msra.mxu0 0.0
    %1619 = vmatprep.subr.mxu0 0.0
    %1620 = vmatpush2.msra.mxu0 0.0
    %1621 = vmatprep.subr.mxu0 0.0
    %1622 = vmatpush2.msra.mxu0 0.0
    %1623 = vmatprep.subr.mxu0 0.0
    %1624 = vmatpush2.msra.mxu0 0.0
    %1625 = vmatprep.mubr.f32.mxu0 0.0
    %v1626 = vand.u32 %v1131, 4294901760
    %1627 = vmatmul.mubr.f32.gmra.mxu0 %v1626
    %v1628 = vpop.f32.mrf.mxu0
    %v1629 = vadd.f32 %v1550, %v1628
    %v1630 = vpop.f32.mrf.mxu0
    %1631 = vmatprep.mubr.f32.mxu0 0.0
    %v1632 = vand.u32 %v1134, 4294901760
    %1633 = vmatmul.mubr.f32.gmra.mxu0 %v1632
    %v1634 = vpop.f32.mrf.mxu0
    %v1635 = vadd.f32 %v1556, %v1634
    %v1636 = vpop.f32.mrf.mxu0
    %1637 = vdwg.mxu0
    %v1639 = vsel %vm91, %v591, 0
    %v1642 = vsel %vm91, %v597, 0
    %v1645 = vsel %vm91, %v1110, 0
    %v1648 = vsel %vm91, %v1116, 0
    %1650 = vmatprep.subr.mxu0 0.0
    %1651 = vmatpush1.xpose.msra.mxu0 0.0
    %1652 = vmatprep.subr.mxu0 0.0
    %1653 = vmatpush1.xpose.msra.mxu0 0.0
    %1654 = vmatprep.subr.mxu0 0.0
    %1655 = vmatpush1.xpose.msra.mxu0 0.0
    %1656 = vmatprep.subr.mxu0 0.0
    %1657 = vmatpush1.xpose.msra.mxu0 0.0
    %1658 = vmatprep.subr.mxu0 0.0
    %1659 = vmatpush1.xpose.msra.mxu0 0.0
    %1660 = vmatprep.subr.mxu0 0.0
    %1661 = vmatpush1.xpose.msra.mxu0 0.0
    %1662 = vmatprep.subr.mxu0 0.0
    %1663 = vmatpush1.xpose.msra.mxu0 0.0
    %1664 = vmatprep.subr.mxu0 0.0
    %1665 = vmatpush1.xpose.msra.mxu0 0.0
    %1666 = vmatprep.subr.mxu0 0.0
    %1667 = vmatpush1.xpose.msra.mxu0 0.0
    %1668 = vmatprep.subr.mxu0 0.0
    %1669 = vmatpush1.xpose.msra.mxu0 0.0
    %1670 = vmatprep.subr.mxu0 0.0
    %1671 = vmatpush1.xpose.msra.mxu0 0.0
    %1672 = vmatprep.subr.mxu0 0.0
    %1673 = vmatpush1.xpose.msra.mxu0 0.0
    %1674 = vmatprep.subr.mxu0 0.0
    %1675 = vmatpush1.xpose.msra.mxu0 0.0
    %1676 = vmatprep.subr.mxu0 0.0
    %1677 = vmatpush1.xpose.msra.mxu0 0.0
    %1678 = vmatprep.subr.mxu0 0.0
    %v1679 = vand.u32 %v1648, 4294901760
    %1680 = vmatpush1.xpose.msra.mxu0 %v1679
    %1681 = vmatprep.subr.mxu0 0.0
    %v1682 = vand.u32 %v1645, 4294901760
    %1683 = vmatpush1.xpose.msra.mxu0 %v1682
    %1684 = vmatprep.subr.mxu0 0.0
    %1685 = vmatpush2.xpose.msra.mxu0 0.0
    %1686 = vmatprep.subr.mxu0 0.0
    %1687 = vmatpush2.xpose.msra.mxu0 0.0
    %1688 = vmatprep.subr.mxu0 0.0
    %1689 = vmatpush2.xpose.msra.mxu0 0.0
    %1690 = vmatprep.subr.mxu0 0.0
    %1691 = vmatpush2.xpose.msra.mxu0 0.0
    %1692 = vmatprep.subr.mxu0 0.0
    %1693 = vmatpush2.xpose.msra.mxu0 0.0
    %1694 = vmatprep.subr.mxu0 0.0
    %1695 = vmatpush2.xpose.msra.mxu0 0.0
    %1696 = vmatprep.subr.mxu0 0.0
    %1697 = vmatpush2.xpose.msra.mxu0 0.0
    %1698 = vmatprep.subr.mxu0 0.0
    %1699 = vmatpush2.xpose.msra.mxu0 0.0
    %1700 = vmatprep.subr.mxu0 0.0
    %1701 = vmatpush2.xpose.msra.mxu0 0.0
    %1702 = vmatprep.subr.mxu0 0.0
    %1703 = vmatpush2.xpose.msra.mxu0 0.0
    %1704 = vmatprep.subr.mxu0 0.0
    %1705 = vmatpush2.xpose.msra.mxu0 0.0
    %1706 = vmatprep.subr.mxu0 0.0
    %1707 = vmatpush2.xpose.msra.mxu0 0.0
    %1708 = vmatprep.subr.mxu0 0.0
    %1709 = vmatpush2.xpose.msra.mxu0 0.0
    %1710 = vmatprep.subr.mxu0 0.0
    %1711 = vmatpush2.xpose.msra.mxu0 0.0
    %1712 = vmatprep.subr.mxu0 0.0
    %1713 = vmatpush2.xpose.msra.mxu0 0.0
    %1714 = vmatprep.subr.mxu0 0.0
    %1715 = vmatpush2.xpose.msra.mxu0 0.0
    %1716 = vmatprep.mubr.f32.mxu0 0.0
    %v1717 = vand.u32 %v1639, 4294901760
    %v1718 = vsub.f32 %v1639, %v1717
    %v1719 = vand.u32 %v1718, 4294901760
    %v1720 = vsub.f32 %v1718, %v1719
    %v1721 = vand.u32 %v1720, 4294901760
    %1722 = vmatmul.mubr.f32.gmra.mxu0 %v1721
    %v1723 = vpop.f32.mrf.mxu0
    %v1724 = vadd.f32 0.0, %v1723
    %v1725 = vpop.f32.mrf.mxu0
    %1726 = vmatprep.mubr.f32.mxu0 0.0
    %v1727 = vand.u32 %v1642, 4294901760
    %v1728 = vsub.f32 %v1642, %v1727
    %v1729 = vand.u32 %v1728, 4294901760
    %v1730 = vsub.f32 %v1728, %v1729
    %v1731 = vand.u32 %v1730, 4294901760
    %1732 = vmatmul.mubr.f32.gmra.mxu0 %v1731
    %v1733 = vpop.f32.mrf.mxu0
    %v1734 = vadd.f32 0.0, %v1733
    %v1735 = vpop.f32.mrf.mxu0
    %1736 = vdwg.mxu0
    %1737 = vmatprep.subr.mxu0 0.0
    %1738 = vmatpush1.xpose.msra.mxu0 0.0
    %1739 = vmatprep.subr.mxu0 0.0
    %1740 = vmatpush1.xpose.msra.mxu0 0.0
    %1741 = vmatprep.subr.mxu0 0.0
    %1742 = vmatpush1.xpose.msra.mxu0 0.0
    %1743 = vmatprep.subr.mxu0 0.0
    %1744 = vmatpush1.xpose.msra.mxu0 0.0
    %1745 = vmatprep.subr.mxu0 0.0
    %1746 = vmatpush1.xpose.msra.mxu0 0.0
    %1747 = vmatprep.subr.mxu0 0.0
    %1748 = vmatpush1.xpose.msra.mxu0 0.0
    %1749 = vmatprep.subr.mxu0 0.0
    %1750 = vmatpush1.xpose.msra.mxu0 0.0
    %1751 = vmatprep.subr.mxu0 0.0
    %1752 = vmatpush1.xpose.msra.mxu0 0.0
    %1753 = vmatprep.subr.mxu0 0.0
    %1754 = vmatpush1.xpose.msra.mxu0 0.0
    %1755 = vmatprep.subr.mxu0 0.0
    %1756 = vmatpush1.xpose.msra.mxu0 0.0
    %1757 = vmatprep.subr.mxu0 0.0
    %1758 = vmatpush1.xpose.msra.mxu0 0.0
    %1759 = vmatprep.subr.mxu0 0.0
    %1760 = vmatpush1.xpose.msra.mxu0 0.0
    %1761 = vmatprep.subr.mxu0 0.0
    %1762 = vmatpush1.xpose.msra.mxu0 0.0
    %1763 = vmatprep.subr.mxu0 0.0
    %1764 = vmatpush1.xpose.msra.mxu0 0.0
    %1765 = vmatprep.subr.mxu0 0.0
    %v1766 = vand.u32 %v1648, 4294901760
    %v1767 = vsub.f32 %v1648, %v1766
    %v1768 = vand.u32 %v1767, 4294901760
    %v1769 = vsub.f32 %v1767, %v1768
    %v1770 = vand.u32 %v1769, 4294901760
    %1771 = vmatpush1.xpose.msra.mxu0 %v1770
    %1772 = vmatprep.subr.mxu0 0.0
    %v1773 = vand.u32 %v1645, 4294901760
    %v1774 = vsub.f32 %v1645, %v1773
    %v1775 = vand.u32 %v1774, 4294901760
    %v1776 = vsub.f32 %v1774, %v1775
    %v1777 = vand.u32 %v1776, 4294901760
    %1778 = vmatpush1.xpose.msra.mxu0 %v1777
    %1779 = vmatprep.subr.mxu0 0.0
    %1780 = vmatpush2.xpose.msra.mxu0 0.0
    %1781 = vmatprep.subr.mxu0 0.0
    %1782 = vmatpush2.xpose.msra.mxu0 0.0
    %1783 = vmatprep.subr.mxu0 0.0
    %1784 = vmatpush2.xpose.msra.mxu0 0.0
    %1785 = vmatprep.subr.mxu0 0.0
    %1786 = vmatpush2.xpose.msra.mxu0 0.0
    %1787 = vmatprep.subr.mxu0 0.0
    %1788 = vmatpush2.xpose.msra.mxu0 0.0
    %1789 = vmatprep.subr.mxu0 0.0
    %1790 = vmatpush2.xpose.msra.mxu0 0.0
    %1791 = vmatprep.subr.mxu0 0.0
    %1792 = vmatpush2.xpose.msra.mxu0 0.0
    %1793 = vmatprep.subr.mxu0 0.0
    %1794 = vmatpush2.xpose.msra.mxu0 0.0
    %1795 = vmatprep.subr.mxu0 0.0
    %1796 = vmatpush2.xpose.msra.mxu0 0.0
    %1797 = vmatprep.subr.mxu0 0.0
    %1798 = vmatpush2.xpose.msra.mxu0 0.0
    %1799 = vmatprep.subr.mxu0 0.0
    %1800 = vmatpush2.xpose.msra.mxu0 0.0
    %1801 = vmatprep.subr.mxu0 0.0
    %1802 = vmatpush2.xpose.msra.mxu0 0.0
    %1803 = vmatprep.subr.mxu0 0.0
    %1804 = vmatpush2.xpose.msra.mxu0 0.0
    %1805 = vmatprep.subr.mxu0 0.0
    %1806 = vmatpush2.xpose.msra.mxu0 0.0
    %1807 = vmatprep.subr.mxu0 0.0
    %1808 = vmatpush2.xpose.msra.mxu0 0.0
    %1809 = vmatprep.subr.mxu0 0.0
    %1810 = vmatpush2.xpose.msra.mxu0 0.0
    %1811 = vmatprep.mubr.f32.mxu0 0.0
    %v1812 = vand.u32 %v1639, 4294901760
    %1813 = vmatmul.mubr.f32.gmra.mxu0 %v1812
    %v1814 = vpop.f32.mrf.mxu0
    %v1815 = vadd.f32 %v1724, %v1814
    %v1816 = vpop.f32.mrf.mxu0
    %1817 = vmatprep.mubr.f32.mxu0 0.0
    %v1818 = vand.u32 %v1642, 4294901760
    %1819 = vmatmul.mubr.f32.gmra.mxu0 %v1818
    %v1820 = vpop.f32.mrf.mxu0
    %v1821 = vadd.f32 %v1734, %v1820
    %v1822 = vpop.f32.mrf.mxu0
    %1823 = vdwg.mxu0
    %1824 = vmatprep.subr.mxu0 0.0
    %1825 = vmatpush1.xpose.msra.mxu0 0.0
    %1826 = vmatprep.subr.mxu0 0.0
    %1827 = vmatpush1.xpose.msra.mxu0 0.0
    %1828 = vmatprep.subr.mxu0 0.0
    %1829 = vmatpush1.xpose.msra.mxu0 0.0
    %1830 = vmatprep.subr.mxu0 0.0
    %1831 = vmatpush1.xpose.msra.mxu0 0.0
    %1832 = vmatprep.subr.mxu0 0.0
    %1833 = vmatpush1.xpose.msra.mxu0 0.0
    %1834 = vmatprep.subr.mxu0 0.0
    %1835 = vmatpush1.xpose.msra.mxu0 0.0
    %1836 = vmatprep.subr.mxu0 0.0
    %1837 = vmatpush1.xpose.msra.mxu0 0.0
    %1838 = vmatprep.subr.mxu0 0.0
    %1839 = vmatpush1.xpose.msra.mxu0 0.0
    %1840 = vmatprep.subr.mxu0 0.0
    %1841 = vmatpush1.xpose.msra.mxu0 0.0
    %1842 = vmatprep.subr.mxu0 0.0
    %1843 = vmatpush1.xpose.msra.mxu0 0.0
    %1844 = vmatprep.subr.mxu0 0.0
    %1845 = vmatpush1.xpose.msra.mxu0 0.0
    %1846 = vmatprep.subr.mxu0 0.0
    %1847 = vmatpush1.xpose.msra.mxu0 0.0
    %1848 = vmatprep.subr.mxu0 0.0
    %1849 = vmatpush1.xpose.msra.mxu0 0.0
    %1850 = vmatprep.subr.mxu0 0.0
    %1851 = vmatpush1.xpose.msra.mxu0 0.0
    %1852 = vmatprep.subr.mxu0 0.0
    %v1853 = vand.u32 %v1648, 4294901760
    %v1854 = vsub.f32 %v1648, %v1853
    %1855 = vmatpush1.xpose.msra.mxu0 %v1854
    %1856 = vmatprep.subr.mxu0 0.0
    %v1857 = vand.u32 %v1645, 4294901760
    %v1858 = vsub.f32 %v1645, %v1857
    %1859 = vmatpush1.xpose.msra.mxu0 %v1858
    %1860 = vmatprep.subr.mxu0 0.0
    %1861 = vmatpush2.xpose.msra.mxu0 0.0
    %1862 = vmatprep.subr.mxu0 0.0
    %1863 = vmatpush2.xpose.msra.mxu0 0.0
    %1864 = vmatprep.subr.mxu0 0.0
    %1865 = vmatpush2.xpose.msra.mxu0 0.0
    %1866 = vmatprep.subr.mxu0 0.0
    %1867 = vmatpush2.xpose.msra.mxu0 0.0
    %1868 = vmatprep.subr.mxu0 0.0
    %1869 = vmatpush2.xpose.msra.mxu0 0.0
    %1870 = vmatprep.subr.mxu0 0.0
    %1871 = vmatpush2.xpose.msra.mxu0 0.0
    %1872 = vmatprep.subr.mxu0 0.0
    %1873 = vmatpush2.xpose.msra.mxu0 0.0
    %1874 = vmatprep.subr.mxu0 0.0
    %1875 = vmatpush2.xpose.msra.mxu0 0.0
    %1876 = vmatprep.subr.mxu0 0.0
    %1877 = vmatpush2.xpose.msra.mxu0 0.0
    %1878 = vmatprep.subr.mxu0 0.0
    %1879 = vmatpush2.xpose.msra.mxu0 0.0
    %1880 = vmatprep.subr.mxu0 0.0
    %1881 = vmatpush2.xpose.msra.mxu0 0.0
    %1882 = vmatprep.subr.mxu0 0.0
    %1883 = vmatpush2.xpose.msra.mxu0 0.0
    %1884 = vmatprep.subr.mxu0 0.0
    %1885 = vmatpush2.xpose.msra.mxu0 0.0
    %1886 = vmatprep.subr.mxu0 0.0
    %1887 = vmatpush2.xpose.msra.mxu0 0.0
    %1888 = vmatprep.subr.mxu0 0.0
    %1889 = vmatpush2.xpose.msra.mxu0 0.0
    %1890 = vmatprep.subr.mxu0 0.0
    %1891 = vmatpush2.xpose.msra.mxu0 0.0
    %1892 = vmatprep.mubr.f32.mxu0 0.0
    %v1893 = vand.u32 %v1639, 4294901760
    %v1894 = vsub.f32 %v1639, %v1893
    %1895 = vmatmul.mubr.f32.gmra.mxu0 %v1894
    %v1896 = vpop.f32.mrf.mxu0
    %v1897 = vadd.f32 %v1815, %v1896
    %v1898 = vpop.f32.mrf.mxu0
    %1899 = vmatprep.mubr.f32.mxu0 0.0
    %v1900 = vand.u32 %v1642, 4294901760
    %v1901 = vsub.f32 %v1642, %v1900
    %1902 = vmatmul.mubr.f32.gmra.mxu0 %v1901
    %v1903 = vpop.f32.mrf.mxu0
    %v1904 = vadd.f32 %v1821, %v1903
    %v1905 = vpop.f32.mrf.mxu0
    %1906 = vdwg.mxu0
    %1907 = vmatprep.subr.mxu0 0.0
    %1908 = vmatpush1.xpose.msra.mxu0 0.0
    %1909 = vmatprep.subr.mxu0 0.0
    %1910 = vmatpush1.xpose.msra.mxu0 0.0
    %1911 = vmatprep.subr.mxu0 0.0
    %1912 = vmatpush1.xpose.msra.mxu0 0.0
    %1913 = vmatprep.subr.mxu0 0.0
    %1914 = vmatpush1.xpose.msra.mxu0 0.0
    %1915 = vmatprep.subr.mxu0 0.0
    %1916 = vmatpush1.xpose.msra.mxu0 0.0
    %1917 = vmatprep.subr.mxu0 0.0
    %1918 = vmatpush1.xpose.msra.mxu0 0.0
    %1919 = vmatprep.subr.mxu0 0.0
    %1920 = vmatpush1.xpose.msra.mxu0 0.0
    %1921 = vmatprep.subr.mxu0 0.0
    %1922 = vmatpush1.xpose.msra.mxu0 0.0
    %1923 = vmatprep.subr.mxu0 0.0
    %1924 = vmatpush1.xpose.msra.mxu0 0.0
    %1925 = vmatprep.subr.mxu0 0.0
    %1926 = vmatpush1.xpose.msra.mxu0 0.0
    %1927 = vmatprep.subr.mxu0 0.0
    %1928 = vmatpush1.xpose.msra.mxu0 0.0
    %1929 = vmatprep.subr.mxu0 0.0
    %1930 = vmatpush1.xpose.msra.mxu0 0.0
    %1931 = vmatprep.subr.mxu0 0.0
    %1932 = vmatpush1.xpose.msra.mxu0 0.0
    %1933 = vmatprep.subr.mxu0 0.0
    %1934 = vmatpush1.xpose.msra.mxu0 0.0
    %1935 = vmatprep.subr.mxu0 0.0
    %v1936 = vand.u32 %v1648, 4294901760
    %1937 = vmatpush1.xpose.msra.mxu0 %v1936
    %1938 = vmatprep.subr.mxu0 0.0
    %v1939 = vand.u32 %v1645, 4294901760
    %1940 = vmatpush1.xpose.msra.mxu0 %v1939
    %1941 = vmatprep.subr.mxu0 0.0
    %1942 = vmatpush2.xpose.msra.mxu0 0.0
    %1943 = vmatprep.subr.mxu0 0.0
    %1944 = vmatpush2.xpose.msra.mxu0 0.0
    %1945 = vmatprep.subr.mxu0 0.0
    %1946 = vmatpush2.xpose.msra.mxu0 0.0
    %1947 = vmatprep.subr.mxu0 0.0
    %1948 = vmatpush2.xpose.msra.mxu0 0.0
    %1949 = vmatprep.subr.mxu0 0.0
    %1950 = vmatpush2.xpose.msra.mxu0 0.0
    %1951 = vmatprep.subr.mxu0 0.0
    %1952 = vmatpush2.xpose.msra.mxu0 0.0
    %1953 = vmatprep.subr.mxu0 0.0
    %1954 = vmatpush2.xpose.msra.mxu0 0.0
    %1955 = vmatprep.subr.mxu0 0.0
    %1956 = vmatpush2.xpose.msra.mxu0 0.0
    %1957 = vmatprep.subr.mxu0 0.0
    %1958 = vmatpush2.xpose.msra.mxu0 0.0
    %1959 = vmatprep.subr.mxu0 0.0
    %1960 = vmatpush2.xpose.msra.mxu0 0.0
    %1961 = vmatprep.subr.mxu0 0.0
    %1962 = vmatpush2.xpose.msra.mxu0 0.0
    %1963 = vmatprep.subr.mxu0 0.0
    %1964 = vmatpush2.xpose.msra.mxu0 0.0
    %1965 = vmatprep.subr.mxu0 0.0
    %1966 = vmatpush2.xpose.msra.mxu0 0.0
    %1967 = vmatprep.subr.mxu0 0.0
    %1968 = vmatpush2.xpose.msra.mxu0 0.0
    %1969 = vmatprep.subr.mxu0 0.0
    %1970 = vmatpush2.xpose.msra.mxu0 0.0
    %1971 = vmatprep.subr.mxu0 0.0
    %1972 = vmatpush2.xpose.msra.mxu0 0.0
    %1973 = vmatprep.mubr.f32.mxu0 0.0
    %v1974 = vand.u32 %v1639, 4294901760
    %v1975 = vsub.f32 %v1639, %v1974
    %v1976 = vand.u32 %v1975, 4294901760
    %1977 = vmatmul.mubr.f32.gmra.mxu0 %v1976
    %v1978 = vpop.f32.mrf.mxu0
    %v1979 = vadd.f32 %v1897, %v1978
    %v1980 = vpop.f32.mrf.mxu0
    %1981 = vmatprep.mubr.f32.mxu0 0.0
    %v1982 = vand.u32 %v1642, 4294901760
    %v1983 = vsub.f32 %v1642, %v1982
    %v1984 = vand.u32 %v1983, 4294901760
    %1985 = vmatmul.mubr.f32.gmra.mxu0 %v1984
    %v1986 = vpop.f32.mrf.mxu0
    %v1987 = vadd.f32 %v1904, %v1986
    %v1988 = vpop.f32.mrf.mxu0
    %1989 = vdwg.mxu0
    %1990 = vmatprep.subr.mxu0 0.0
    %1991 = vmatpush1.xpose.msra.mxu0 0.0
    %1992 = vmatprep.subr.mxu0 0.0
    %1993 = vmatpush1.xpose.msra.mxu0 0.0
    %1994 = vmatprep.subr.mxu0 0.0
    %1995 = vmatpush1.xpose.msra.mxu0 0.0
    %1996 = vmatprep.subr.mxu0 0.0
    %1997 = vmatpush1.xpose.msra.mxu0 0.0
    %1998 = vmatprep.subr.mxu0 0.0
    %1999 = vmatpush1.xpose.msra.mxu0 0.0
    %2000 = vmatprep.subr.mxu0 0.0
    %2001 = vmatpush1.xpose.msra.mxu0 0.0
    %2002 = vmatprep.subr.mxu0 0.0
    %2003 = vmatpush1.xpose.msra.mxu0 0.0
    %2004 = vmatprep.subr.mxu0 0.0
    %2005 = vmatpush1.xpose.msra.mxu0 0.0
    %2006 = vmatprep.subr.mxu0 0.0
    %2007 = vmatpush1.xpose.msra.mxu0 0.0
    %2008 = vmatprep.subr.mxu0 0.0
    %2009 = vmatpush1.xpose.msra.mxu0 0.0
    %2010 = vmatprep.subr.mxu0 0.0
    %2011 = vmatpush1.xpose.msra.mxu0 0.0
    %2012 = vmatprep.subr.mxu0 0.0
    %2013 = vmatpush1.xpose.msra.mxu0 0.0
    %2014 = vmatprep.subr.mxu0 0.0
    %2015 = vmatpush1.xpose.msra.mxu0 0.0
    %2016 = vmatprep.subr.mxu0 0.0
    %2017 = vmatpush1.xpose.msra.mxu0 0.0
    %2018 = vmatprep.subr.mxu0 0.0
    %v2019 = vand.u32 %v1648, 4294901760
    %v2020 = vsub.f32 %v1648, %v2019
    %v2021 = vand.u32 %v2020, 4294901760
    %2022 = vmatpush1.xpose.msra.mxu0 %v2021
    %2023 = vmatprep.subr.mxu0 0.0
    %v2024 = vand.u32 %v1645, 4294901760
    %v2025 = vsub.f32 %v1645, %v2024
    %v2026 = vand.u32 %v2025, 4294901760
    %2027 = vmatpush1.xpose.msra.mxu0 %v2026
    %2028 = vmatprep.subr.mxu0 0.0
    %2029 = vmatpush2.xpose.msra.mxu0 0.0
    %2030 = vmatprep.subr.mxu0 0.0
    %2031 = vmatpush2.xpose.msra.mxu0 0.0
    %2032 = vmatprep.subr.mxu0 0.0
    %2033 = vmatpush2.xpose.msra.mxu0 0.0
    %2034 = vmatprep.subr.mxu0 0.0
    %2035 = vmatpush2.xpose.msra.mxu0 0.0
    %2036 = vmatprep.subr.mxu0 0.0
    %2037 = vmatpush2.xpose.msra.mxu0 0.0
    %2038 = vmatprep.subr.mxu0 0.0
    %2039 = vmatpush2.xpose.msra.mxu0 0.0
    %2040 = vmatprep.subr.mxu0 0.0
    %2041 = vmatpush2.xpose.msra.mxu0 0.0
    %2042 = vmatprep.subr.mxu0 0.0
    %2043 = vmatpush2.xpose.msra.mxu0 0.0
    %2044 = vmatprep.subr.mxu0 0.0
    %2045 = vmatpush2.xpose.msra.mxu0 0.0
    %2046 = vmatprep.subr.mxu0 0.0
    %2047 = vmatpush2.xpose.msra.mxu0 0.0
    %2048 = vmatprep.subr.mxu0 0.0
    %2049 = vmatpush2.xpose.msra.mxu0 0.0
    %2050 = vmatprep.subr.mxu0 0.0
    %2051 = vmatpush2.xpose.msra.mxu0 0.0
    %2052 = vmatprep.subr.mxu0 0.0
    %2053 = vmatpush2.xpose.msra.mxu0 0.0
    %2054 = vmatprep.subr.mxu0 0.0
    %2055 = vmatpush2.xpose.msra.mxu0 0.0
    %2056 = vmatprep.subr.mxu0 0.0
    %2057 = vmatpush2.xpose.msra.mxu0 0.0
    %2058 = vmatprep.subr.mxu0 0.0
    %2059 = vmatpush2.xpose.msra.mxu0 0.0
    %2060 = vmatprep.mubr.f32.mxu0 0.0
    %v2061 = vand.u32 %v1639, 4294901760
    %2062 = vmatmul.mubr.f32.gmra.mxu0 %v2061
    %v2063 = vpop.f32.mrf.mxu0
    %v2064 = vadd.f32 %v1979, %v2063
    %v2065 = vpop.f32.mrf.mxu0
    %2066 = vmatprep.mubr.f32.mxu0 0.0
    %v2067 = vand.u32 %v1642, 4294901760
    %2068 = vmatmul.mubr.f32.gmra.mxu0 %v2067
    %v2069 = vpop.f32.mrf.mxu0
    %v2070 = vadd.f32 %v1987, %v2069
    %v2071 = vpop.f32.mrf.mxu0
    %2072 = vdwg.mxu0
    %2073 = vmatprep.subr.mxu0 0.0
    %2074 = vmatpush1.xpose.msra.mxu0 0.0
    %2075 = vmatprep.subr.mxu0 0.0
    %2076 = vmatpush1.xpose.msra.mxu0 0.0
    %2077 = vmatprep.subr.mxu0 0.0
    %2078 = vmatpush1.xpose.msra.mxu0 0.0
    %2079 = vmatprep.subr.mxu0 0.0
    %2080 = vmatpush1.xpose.msra.mxu0 0.0
    %2081 = vmatprep.subr.mxu0 0.0
    %2082 = vmatpush1.xpose.msra.mxu0 0.0
    %2083 = vmatprep.subr.mxu0 0.0
    %2084 = vmatpush1.xpose.msra.mxu0 0.0
    %2085 = vmatprep.subr.mxu0 0.0
    %2086 = vmatpush1.xpose.msra.mxu0 0.0
    %2087 = vmatprep.subr.mxu0 0.0
    %2088 = vmatpush1.xpose.msra.mxu0 0.0
    %2089 = vmatprep.subr.mxu0 0.0
    %2090 = vmatpush1.xpose.msra.mxu0 0.0
    %2091 = vmatprep.subr.mxu0 0.0
    %2092 = vmatpush1.xpose.msra.mxu0 0.0
    %2093 = vmatprep.subr.mxu0 0.0
    %2094 = vmatpush1.xpose.msra.mxu0 0.0
    %2095 = vmatprep.subr.mxu0 0.0
    %2096 = vmatpush1.xpose.msra.mxu0 0.0
    %2097 = vmatprep.subr.mxu0 0.0
    %2098 = vmatpush1.xpose.msra.mxu0 0.0
    %2099 = vmatprep.subr.mxu0 0.0
    %2100 = vmatpush1.xpose.msra.mxu0 0.0
    %2101 = vmatprep.subr.mxu0 0.0
    %v2102 = vand.u32 %v1648, 4294901760
    %2103 = vmatpush1.xpose.msra.mxu0 %v2102
    %2104 = vmatprep.subr.mxu0 0.0
    %v2105 = vand.u32 %v1645, 4294901760
    %2106 = vmatpush1.xpose.msra.mxu0 %v2105
    %2107 = vmatprep.subr.mxu0 0.0
    %2108 = vmatpush2.xpose.msra.mxu0 0.0
    %2109 = vmatprep.subr.mxu0 0.0
    %2110 = vmatpush2.xpose.msra.mxu0 0.0
    %2111 = vmatprep.subr.mxu0 0.0
    %2112 = vmatpush2.xpose.msra.mxu0 0.0
    %2113 = vmatprep.subr.mxu0 0.0
    %2114 = vmatpush2.xpose.msra.mxu0 0.0
    %2115 = vmatprep.subr.mxu0 0.0
    %2116 = vmatpush2.xpose.msra.mxu0 0.0
    %2117 = vmatprep.subr.mxu0 0.0
    %2118 = vmatpush2.xpose.msra.mxu0 0.0
    %2119 = vmatprep.subr.mxu0 0.0
    %2120 = vmatpush2.xpose.msra.mxu0 0.0
    %2121 = vmatprep.subr.mxu0 0.0
    %2122 = vmatpush2.xpose.msra.mxu0 0.0
    %2123 = vmatprep.subr.mxu0 0.0
    %2124 = vmatpush2.xpose.msra.mxu0 0.0
    %2125 = vmatprep.subr.mxu0 0.0
    %2126 = vmatpush2.xpose.msra.mxu0 0.0
    %2127 = vmatprep.subr.mxu0 0.0
    %2128 = vmatpush2.xpose.msra.mxu0 0.0
    %2129 = vmatprep.subr.mxu0 0.0
    %2130 = vmatpush2.xpose.msra.mxu0 0.0
    %2131 = vmatprep.subr.mxu0 0.0
    %2132 = vmatpush2.xpose.msra.mxu0 0.0
    %2133 = vmatprep.subr.mxu0 0.0
    %2134 = vmatpush2.xpose.msra.mxu0 0.0
    %2135 = vmatprep.subr.mxu0 0.0
    %2136 = vmatpush2.xpose.msra.mxu0 0.0
    %2137 = vmatprep.subr.mxu0 0.0
    %2138 = vmatpush2.xpose.msra.mxu0 0.0
    %2139 = vmatprep.mubr.f32.mxu0 0.0
    %v2140 = vand.u32 %v1639, 4294901760
    %2141 = vmatmul.mubr.f32.gmra.mxu0 %v2140
    %v2142 = vpop.f32.mrf.mxu0
    %v2143 = vadd.f32 %v2064, %v2142
    %v2144 = vpop.f32.mrf.mxu0
    %2145 = vmatprep.mubr.f32.mxu0 0.0
    %v2146 = vand.u32 %v1642, 4294901760
    %2147 = vmatmul.mubr.f32.gmra.mxu0 %v2146
    %v2148 = vpop.f32.mrf.mxu0
    %v2149 = vadd.f32 %v2070, %v2148
    %v2150 = vpop.f32.mrf.mxu0
    %2151 = vdwg.mxu0
    %v2152 = vsel %vm91, %v2143, -inf
    %2153 = vmax.xlane.f32.xlu0 %v2152
    %v2154 = vpop.xlane.xlu0 %2153
    %v2155 = vsel %vm91, %v2149, -inf
    %2156 = vmax.xlane.f32.xlu0 %v2155
    %v2157 = vpop.xlane.xlu0 %2156
    %v2158 = vsub.f32 %v2143, %v2154
    %v2159 = vsub.f32 %v2149, %v2157
    %v2160 = vmul.f32 %v2158, 1.442695
    %v2161 = vpow.pop %v2160
    %v2162 = vmul.f32 %v2159, 1.442695
    %v2163 = vpow.pop %v2162
    %v2164 = vsel %vm91, %v2161, 0.0
    %2165 = vadd.xlane.f32.xlu0 %v2164
    %v2166 = vpop.xlane.xlu0 %2165
    %v2167 = vsel %vm91, %v2163, 0.0
    %2168 = vadd.xlane.f32.xlu0 %v2167
    %v2169 = vpop.xlane.xlu0 %2168
    %v2170 = vrcp.pop %v2166
    %v2171 = vmul.f32 %v2161, %v2170
    %v2172 = vrcp.pop %v2169
    %v2173 = vmul.f32 %v2163, %v2172
    %v2175 = vsel %vm91, %v2171, 0
    %v2178 = vsel %vm91, %v2173, 0
    %2180 = vmatprep.subr.mxu0 0.0
    %2181 = vmatpush1.msra.mxu0 0.0
    %2182 = vmatprep.subr.mxu0 0.0
    %2183 = vmatpush1.msra.mxu0 0.0
    %2184 = vmatprep.subr.mxu0 0.0
    %2185 = vmatpush1.msra.mxu0 0.0
    %2186 = vmatprep.subr.mxu0 0.0
    %2187 = vmatpush1.msra.mxu0 0.0
    %2188 = vmatprep.subr.mxu0 0.0
    %2189 = vmatpush1.msra.mxu0 0.0
    %2190 = vmatprep.subr.mxu0 0.0
    %2191 = vmatpush1.msra.mxu0 0.0
    %2192 = vmatprep.subr.mxu0 0.0
    %2193 = vmatpush1.msra.mxu0 0.0
    %2194 = vmatprep.subr.mxu0 0.0
    %2195 = vmatpush1.msra.mxu0 0.0
    %2196 = vmatprep.subr.mxu0 0.0
    %2197 = vmatpush1.msra.mxu0 0.0
    %2198 = vmatprep.subr.mxu0 0.0
    %2199 = vmatpush1.msra.mxu0 0.0
    %2200 = vmatprep.subr.mxu0 0.0
    %2201 = vmatpush1.msra.mxu0 0.0
    %2202 = vmatprep.subr.mxu0 0.0
    %2203 = vmatpush1.msra.mxu0 0.0
    %2204 = vmatprep.subr.mxu0 0.0
    %2205 = vmatpush1.msra.mxu0 0.0
    %2206 = vmatprep.subr.mxu0 0.0
    %2207 = vmatpush1.msra.mxu0 0.0
    %2208 = vmatprep.subr.mxu0 0.0
    %v2209 = vand.u32 %v1635, 4294901760
    %2210 = vmatpush1.msra.mxu0 %v2209
    %2211 = vmatprep.subr.mxu0 0.0
    %v2212 = vand.u32 %v1629, 4294901760
    %2213 = vmatpush1.msra.mxu0 %v2212
    %2214 = vmatprep.subr.mxu0 0.0
    %2215 = vmatpush2.msra.mxu0 0.0
    %2216 = vmatprep.subr.mxu0 0.0
    %2217 = vmatpush2.msra.mxu0 0.0
    %2218 = vmatprep.subr.mxu0 0.0
    %2219 = vmatpush2.msra.mxu0 0.0
    %2220 = vmatprep.subr.mxu0 0.0
    %2221 = vmatpush2.msra.mxu0 0.0
    %2222 = vmatprep.subr.mxu0 0.0
    %2223 = vmatpush2.msra.mxu0 0.0
    %2224 = vmatprep.subr.mxu0 0.0
    %2225 = vmatpush2.msra.mxu0 0.0
    %2226 = vmatprep.subr.mxu0 0.0
    %2227 = vmatpush2.msra.mxu0 0.0
    %2228 = vmatprep.subr.mxu0 0.0
    %2229 = vmatpush2.msra.mxu0 0.0
    %2230 = vmatprep.subr.mxu0 0.0
    %2231 = vmatpush2.msra.mxu0 0.0
    %2232 = vmatprep.subr.mxu0 0.0
    %2233 = vmatpush2.msra.mxu0 0.0
    %2234 = vmatprep.subr.mxu0 0.0
    %2235 = vmatpush2.msra.mxu0 0.0
    %2236 = vmatprep.subr.mxu0 0.0
    %2237 = vmatpush2.msra.mxu0 0.0
    %2238 = vmatprep.subr.mxu0 0.0
    %2239 = vmatpush2.msra.mxu0 0.0
    %2240 = vmatprep.subr.mxu0 0.0
    %2241 = vmatpush2.msra.mxu0 0.0
    %2242 = vmatprep.subr.mxu0 0.0
    %2243 = vmatpush2.msra.mxu0 0.0
    %2244 = vmatprep.subr.mxu0 0.0
    %2245 = vmatpush2.msra.mxu0 0.0
    %2246 = vmatprep.mubr.f32.mxu0 0.0
    %v2247 = vand.u32 %v2175, 4294901760
    %v2248 = vsub.f32 %v2175, %v2247
    %v2249 = vand.u32 %v2248, 4294901760
    %v2250 = vsub.f32 %v2248, %v2249
    %v2251 = vand.u32 %v2250, 4294901760
    %2252 = vmatmul.mubr.f32.gmra.mxu0 %v2251
    %v2253 = vpop.f32.mrf.mxu0
    %v2254 = vadd.f32 0.0, %v2253
    %v2255 = vpop.f32.mrf.mxu0
    %2256 = vmatprep.mubr.f32.mxu0 0.0
    %v2257 = vand.u32 %v2178, 4294901760
    %v2258 = vsub.f32 %v2178, %v2257
    %v2259 = vand.u32 %v2258, 4294901760
    %v2260 = vsub.f32 %v2258, %v2259
    %v2261 = vand.u32 %v2260, 4294901760
    %2262 = vmatmul.mubr.f32.gmra.mxu0 %v2261
    %v2263 = vpop.f32.mrf.mxu0
    %v2264 = vadd.f32 0.0, %v2263
    %v2265 = vpop.f32.mrf.mxu0
    %2266 = vdwg.mxu0
    %2267 = vmatprep.subr.mxu0 0.0
    %2268 = vmatpush1.msra.mxu0 0.0
    %2269 = vmatprep.subr.mxu0 0.0
    %2270 = vmatpush1.msra.mxu0 0.0
    %2271 = vmatprep.subr.mxu0 0.0
    %2272 = vmatpush1.msra.mxu0 0.0
    %2273 = vmatprep.subr.mxu0 0.0
    %2274 = vmatpush1.msra.mxu0 0.0
    %2275 = vmatprep.subr.mxu0 0.0
    %2276 = vmatpush1.msra.mxu0 0.0
    %2277 = vmatprep.subr.mxu0 0.0
    %2278 = vmatpush1.msra.mxu0 0.0
    %2279 = vmatprep.subr.mxu0 0.0
    %2280 = vmatpush1.msra.mxu0 0.0
    %2281 = vmatprep.subr.mxu0 0.0
    %2282 = vmatpush1.msra.mxu0 0.0
    %2283 = vmatprep.subr.mxu0 0.0
    %2284 = vmatpush1.msra.mxu0 0.0
    %2285 = vmatprep.subr.mxu0 0.0
    %2286 = vmatpush1.msra.mxu0 0.0
    %2287 = vmatprep.subr.mxu0 0.0
    %2288 = vmatpush1.msra.mxu0 0.0
    %2289 = vmatprep.subr.mxu0 0.0
    %2290 = vmatpush1.msra.mxu0 0.0
    %2291 = vmatprep.subr.mxu0 0.0
    %2292 = vmatpush1.msra.mxu0 0.0
    %2293 = vmatprep.subr.mxu0 0.0
    %2294 = vmatpush1.msra.mxu0 0.0
    %2295 = vmatprep.subr.mxu0 0.0
    %v2296 = vand.u32 %v1635, 4294901760
    %v2297 = vsub.f32 %v1635, %v2296
    %v2298 = vand.u32 %v2297, 4294901760
    %v2299 = vsub.f32 %v2297, %v2298
    %v2300 = vand.u32 %v2299, 4294901760
    %2301 = vmatpush1.msra.mxu0 %v2300
    %2302 = vmatprep.subr.mxu0 0.0
    %v2303 = vand.u32 %v1629, 4294901760
    %v2304 = vsub.f32 %v1629, %v2303
    %v2305 = vand.u32 %v2304, 4294901760
    %v2306 = vsub.f32 %v2304, %v2305
    %v2307 = vand.u32 %v2306, 4294901760
    %2308 = vmatpush1.msra.mxu0 %v2307
    %2309 = vmatprep.subr.mxu0 0.0
    %2310 = vmatpush2.msra.mxu0 0.0
    %2311 = vmatprep.subr.mxu0 0.0
    %2312 = vmatpush2.msra.mxu0 0.0
    %2313 = vmatprep.subr.mxu0 0.0
    %2314 = vmatpush2.msra.mxu0 0.0
    %2315 = vmatprep.subr.mxu0 0.0
    %2316 = vmatpush2.msra.mxu0 0.0
    %2317 = vmatprep.subr.mxu0 0.0
    %2318 = vmatpush2.msra.mxu0 0.0
    %2319 = vmatprep.subr.mxu0 0.0
    %2320 = vmatpush2.msra.mxu0 0.0
    %2321 = vmatprep.subr.mxu0 0.0
    %2322 = vmatpush2.msra.mxu0 0.0
    %2323 = vmatprep.subr.mxu0 0.0
    %2324 = vmatpush2.msra.mxu0 0.0
    %2325 = vmatprep.subr.mxu0 0.0
    %2326 = vmatpush2.msra.mxu0 0.0
    %2327 = vmatprep.subr.mxu0 0.0
    %2328 = vmatpush2.msra.mxu0 0.0
    %2329 = vmatprep.subr.mxu0 0.0
    %2330 = vmatpush2.msra.mxu0 0.0
    %2331 = vmatprep.subr.mxu0 0.0
    %2332 = vmatpush2.msra.mxu0 0.0
    %2333 = vmatprep.subr.mxu0 0.0
    %2334 = vmatpush2.msra.mxu0 0.0
    %2335 = vmatprep.subr.mxu0 0.0
    %2336 = vmatpush2.msra.mxu0 0.0
    %2337 = vmatprep.subr.mxu0 0.0
    %2338 = vmatpush2.msra.mxu0 0.0
    %2339 = vmatprep.subr.mxu0 0.0
    %2340 = vmatpush2.msra.mxu0 0.0
    %2341 = vmatprep.mubr.f32.mxu0 0.0
    %v2342 = vand.u32 %v2175, 4294901760
    %2343 = vmatmul.mubr.f32.gmra.mxu0 %v2342
    %v2344 = vpop.f32.mrf.mxu0
    %v2345 = vadd.f32 %v2254, %v2344
    %v2346 = vpop.f32.mrf.mxu0
    %2347 = vmatprep.mubr.f32.mxu0 0.0
    %v2348 = vand.u32 %v2178, 4294901760
    %2349 = vmatmul.mubr.f32.gmra.mxu0 %v2348
    %v2350 = vpop.f32.mrf.mxu0
    %v2351 = vadd.f32 %v2264, %v2350
    %v2352 = vpop.f32.mrf.mxu0
    %2353 = vdwg.mxu0
    %2354 = vmatprep.subr.mxu0 0.0
    %2355 = vmatpush1.msra.mxu0 0.0
    %2356 = vmatprep.subr.mxu0 0.0
    %2357 = vmatpush1.msra.mxu0 0.0
    %2358 = vmatprep.subr.mxu0 0.0
    %2359 = vmatpush1.msra.mxu0 0.0
    %2360 = vmatprep.subr.mxu0 0.0
    %2361 = vmatpush1.msra.mxu0 0.0
    %2362 = vmatprep.subr.mxu0 0.0
    %2363 = vmatpush1.msra.mxu0 0.0
    %2364 = vmatprep.subr.mxu0 0.0
    %2365 = vmatpush1.msra.mxu0 0.0
    %2366 = vmatprep.subr.mxu0 0.0
    %2367 = vmatpush1.msra.mxu0 0.0
    %2368 = vmatprep.subr.mxu0 0.0
    %2369 = vmatpush1.msra.mxu0 0.0
    %2370 = vmatprep.subr.mxu0 0.0
    %2371 = vmatpush1.msra.mxu0 0.0
    %2372 = vmatprep.subr.mxu0 0.0
    %2373 = vmatpush1.msra.mxu0 0.0
    %2374 = vmatprep.subr.mxu0 0.0
    %2375 = vmatpush1.msra.mxu0 0.0
    %2376 = vmatprep.subr.mxu0 0.0
    %2377 = vmatpush1.msra.mxu0 0.0
    %2378 = vmatprep.subr.mxu0 0.0
    %2379 = vmatpush1.msra.mxu0 0.0
    %2380 = vmatprep.subr.mxu0 0.0
    %2381 = vmatpush1.msra.mxu0 0.0
    %2382 = vmatprep.subr.mxu0 0.0
    %v2383 = vand.u32 %v1635, 4294901760
    %v2384 = vsub.f32 %v1635, %v2383
    %2385 = vmatpush1.msra.mxu0 %v2384
    %2386 = vmatprep.subr.mxu0 0.0
    %v2387 = vand.u32 %v1629, 4294901760
    %v2388 = vsub.f32 %v1629, %v2387
    %2389 = vmatpush1.msra.mxu0 %v2388
    %2390 = vmatprep.subr.mxu0 0.0
    %2391 = vmatpush2.msra.mxu0 0.0
    %2392 = vmatprep.subr.mxu0 0.0
    %2393 = vmatpush2.msra.mxu0 0.0
    %2394 = vmatprep.subr.mxu0 0.0
    %2395 = vmatpush2.msra.mxu0 0.0
    %2396 = vmatprep.subr.mxu0 0.0
    %2397 = vmatpush2.msra.mxu0 0.0
    %2398 = vmatprep.subr.mxu0 0.0
    %2399 = vmatpush2.msra.mxu0 0.0
    %2400 = vmatprep.subr.mxu0 0.0
    %2401 = vmatpush2.msra.mxu0 0.0
    %2402 = vmatprep.subr.mxu0 0.0
    %2403 = vmatpush2.msra.mxu0 0.0
    %2404 = vmatprep.subr.mxu0 0.0
    %2405 = vmatpush2.msra.mxu0 0.0
    %2406 = vmatprep.subr.mxu0 0.0
    %2407 = vmatpush2.msra.mxu0 0.0
    %2408 = vmatprep.subr.mxu0 0.0
    %2409 = vmatpush2.msra.mxu0 0.0
    %2410 = vmatprep.subr.mxu0 0.0
    %2411 = vmatpush2.msra.mxu0 0.0
    %2412 = vmatprep.subr.mxu0 0.0
    %2413 = vmatpush2.msra.mxu0 0.0
    %2414 = vmatprep.subr.mxu0 0.0
    %2415 = vmatpush2.msra.mxu0 0.0
    %2416 = vmatprep.subr.mxu0 0.0
    %2417 = vmatpush2.msra.mxu0 0.0
    %2418 = vmatprep.subr.mxu0 0.0
    %2419 = vmatpush2.msra.mxu0 0.0
    %2420 = vmatprep.subr.mxu0 0.0
    %2421 = vmatpush2.msra.mxu0 0.0
    %2422 = vmatprep.mubr.f32.mxu0 0.0
    %v2423 = vand.u32 %v2175, 4294901760
    %v2424 = vsub.f32 %v2175, %v2423
    %2425 = vmatmul.mubr.f32.gmra.mxu0 %v2424
    %v2426 = vpop.f32.mrf.mxu0
    %v2427 = vadd.f32 %v2345, %v2426
    %v2428 = vpop.f32.mrf.mxu0
    %2429 = vmatprep.mubr.f32.mxu0 0.0
    %v2430 = vand.u32 %v2178, 4294901760
    %v2431 = vsub.f32 %v2178, %v2430
    %2432 = vmatmul.mubr.f32.gmra.mxu0 %v2431
    %v2433 = vpop.f32.mrf.mxu0
    %v2434 = vadd.f32 %v2351, %v2433
    %v2435 = vpop.f32.mrf.mxu0
    %2436 = vdwg.mxu0
    %2437 = vmatprep.subr.mxu0 0.0
    %2438 = vmatpush1.msra.mxu0 0.0
    %2439 = vmatprep.subr.mxu0 0.0
    %2440 = vmatpush1.msra.mxu0 0.0
    %2441 = vmatprep.subr.mxu0 0.0
    %2442 = vmatpush1.msra.mxu0 0.0
    %2443 = vmatprep.subr.mxu0 0.0
    %2444 = vmatpush1.msra.mxu0 0.0
    %2445 = vmatprep.subr.mxu0 0.0
    %2446 = vmatpush1.msra.mxu0 0.0
    %2447 = vmatprep.subr.mxu0 0.0
    %2448 = vmatpush1.msra.mxu0 0.0
    %2449 = vmatprep.subr.mxu0 0.0
    %2450 = vmatpush1.msra.mxu0 0.0
    %2451 = vmatprep.subr.mxu0 0.0
    %2452 = vmatpush1.msra.mxu0 0.0
    %2453 = vmatprep.subr.mxu0 0.0
    %2454 = vmatpush1.msra.mxu0 0.0
    %2455 = vmatprep.subr.mxu0 0.0
    %2456 = vmatpush1.msra.mxu0 0.0
    %2457 = vmatprep.subr.mxu0 0.0
    %2458 = vmatpush1.msra.mxu0 0.0
    %2459 = vmatprep.subr.mxu0 0.0
    %2460 = vmatpush1.msra.mxu0 0.0
    %2461 = vmatprep.subr.mxu0 0.0
    %2462 = vmatpush1.msra.mxu0 0.0
    %2463 = vmatprep.subr.mxu0 0.0
    %2464 = vmatpush1.msra.mxu0 0.0
    %2465 = vmatprep.subr.mxu0 0.0
    %v2466 = vand.u32 %v1635, 4294901760
    %2467 = vmatpush1.msra.mxu0 %v2466
    %2468 = vmatprep.subr.mxu0 0.0
    %v2469 = vand.u32 %v1629, 4294901760
    %2470 = vmatpush1.msra.mxu0 %v2469
    %2471 = vmatprep.subr.mxu0 0.0
    %2472 = vmatpush2.msra.mxu0 0.0
    %2473 = vmatprep.subr.mxu0 0.0
    %2474 = vmatpush2.msra.mxu0 0.0
    %2475 = vmatprep.subr.mxu0 0.0
    %2476 = vmatpush2.msra.mxu0 0.0
    %2477 = vmatprep.subr.mxu0 0.0
    %2478 = vmatpush2.msra.mxu0 0.0
    %2479 = vmatprep.subr.mxu0 0.0
    %2480 = vmatpush2.msra.mxu0 0.0
    %2481 = vmatprep.subr.mxu0 0.0
    %2482 = vmatpush2.msra.mxu0 0.0
    %2483 = vmatprep.subr.mxu0 0.0
    %2484 = vmatpush2.msra.mxu0 0.0
    %2485 = vmatprep.subr.mxu0 0.0
    %2486 = vmatpush2.msra.mxu0 0.0
    %2487 = vmatprep.subr.mxu0 0.0
    %2488 = vmatpush2.msra.mxu0 0.0
    %2489 = vmatprep.subr.mxu0 0.0
    %2490 = vmatpush2.msra.mxu0 0.0
    %2491 = vmatprep.subr.mxu0 0.0
    %2492 = vmatpush2.msra.mxu0 0.0
    %2493 = vmatprep.subr.mxu0 0.0
    %2494 = vmatpush2.msra.mxu0 0.0
    %2495 = vmatprep.subr.mxu0 0.0
    %2496 = vmatpush2.msra.mxu0 0.0
    %2497 = vmatprep.subr.mxu0 0.0
    %2498 = vmatpush2.msra.mxu0 0.0
    %2499 = vmatprep.subr.mxu0 0.0
    %2500 = vmatpush2.msra.mxu0 0.0
    %2501 = vmatprep.subr.mxu0 0.0
    %2502 = vmatpush2.msra.mxu0 0.0
    %2503 = vmatprep.mubr.f32.mxu0 0.0
    %v2504 = vand.u32 %v2175, 4294901760
    %v2505 = vsub.f32 %v2175, %v2504
    %v2506 = vand.u32 %v2505, 4294901760
    %2507 = vmatmul.mubr.f32.gmra.mxu0 %v2506
    %v2508 = vpop.f32.mrf.mxu0
    %v2509 = vadd.f32 %v2427, %v2508
    %v2510 = vpop.f32.mrf.mxu0
    %2511 = vmatprep.mubr.f32.mxu0 0.0
    %v2512 = vand.u32 %v2178, 4294901760
    %v2513 = vsub.f32 %v2178, %v2512
    %v2514 = vand.u32 %v2513, 4294901760
    %2515 = vmatmul.mubr.f32.gmra.mxu0 %v2514
    %v2516 = vpop.f32.mrf.mxu0
    %v2517 = vadd.f32 %v2434, %v2516
    %v2518 = vpop.f32.mrf.mxu0
    %2519 = vdwg.mxu0
    %2520 = vmatprep.subr.mxu0 0.0
    %2521 = vmatpush1.msra.mxu0 0.0
    %2522 = vmatprep.subr.mxu0 0.0
    %2523 = vmatpush1.msra.mxu0 0.0
    %2524 = vmatprep.subr.mxu0 0.0
    %2525 = vmatpush1.msra.mxu0 0.0
    %2526 = vmatprep.subr.mxu0 0.0
    %2527 = vmatpush1.msra.mxu0 0.0
    %2528 = vmatprep.subr.mxu0 0.0
    %2529 = vmatpush1.msra.mxu0 0.0
    %2530 = vmatprep.subr.mxu0 0.0
    %2531 = vmatpush1.msra.mxu0 0.0
    %2532 = vmatprep.subr.mxu0 0.0
    %2533 = vmatpush1.msra.mxu0 0.0
    %2534 = vmatprep.subr.mxu0 0.0
    %2535 = vmatpush1.msra.mxu0 0.0
    %2536 = vmatprep.subr.mxu0 0.0
    %2537 = vmatpush1.msra.mxu0 0.0
    %2538 = vmatprep.subr.mxu0 0.0
    %2539 = vmatpush1.msra.mxu0 0.0
    %2540 = vmatprep.subr.mxu0 0.0
    %2541 = vmatpush1.msra.mxu0 0.0
    %2542 = vmatprep.subr.mxu0 0.0
    %2543 = vmatpush1.msra.mxu0 0.0
    %2544 = vmatprep.subr.mxu0 0.0
    %2545 = vmatpush1.msra.mxu0 0.0
    %2546 = vmatprep.subr.mxu0 0.0
    %2547 = vmatpush1.msra.mxu0 0.0
    %2548 = vmatprep.subr.mxu0 0.0
    %v2549 = vand.u32 %v1635, 4294901760
    %v2550 = vsub.f32 %v1635, %v2549
    %v2551 = vand.u32 %v2550, 4294901760
    %2552 = vmatpush1.msra.mxu0 %v2551
    %2553 = vmatprep.subr.mxu0 0.0
    %v2554 = vand.u32 %v1629, 4294901760
    %v2555 = vsub.f32 %v1629, %v2554
    %v2556 = vand.u32 %v2555, 4294901760
    %2557 = vmatpush1.msra.mxu0 %v2556
    %2558 = vmatprep.subr.mxu0 0.0
    %2559 = vmatpush2.msra.mxu0 0.0
    %2560 = vmatprep.subr.mxu0 0.0
    %2561 = vmatpush2.msra.mxu0 0.0
    %2562 = vmatprep.subr.mxu0 0.0
    %2563 = vmatpush2.msra.mxu0 0.0
    %2564 = vmatprep.subr.mxu0 0.0
    %2565 = vmatpush2.msra.mxu0 0.0
    %2566 = vmatprep.subr.mxu0 0.0
    %2567 = vmatpush2.msra.mxu0 0.0
    %2568 = vmatprep.subr.mxu0 0.0
    %2569 = vmatpush2.msra.mxu0 0.0
    %2570 = vmatprep.subr.mxu0 0.0
    %2571 = vmatpush2.msra.mxu0 0.0
    %2572 = vmatprep.subr.mxu0 0.0
    %2573 = vmatpush2.msra.mxu0 0.0
    %2574 = vmatprep.subr.mxu0 0.0
    %2575 = vmatpush2.msra.mxu0 0.0
    %2576 = vmatprep.subr.mxu0 0.0
    %2577 = vmatpush2.msra.mxu0 0.0
    %2578 = vmatprep.subr.mxu0 0.0
    %2579 = vmatpush2.msra.mxu0 0.0
    %2580 = vmatprep.subr.mxu0 0.0
    %2581 = vmatpush2.msra.mxu0 0.0
    %2582 = vmatprep.subr.mxu0 0.0
    %2583 = vmatpush2.msra.mxu0 0.0
    %2584 = vmatprep.subr.mxu0 0.0
    %2585 = vmatpush2.msra.mxu0 0.0
    %2586 = vmatprep.subr.mxu0 0.0
    %2587 = vmatpush2.msra.mxu0 0.0
    %2588 = vmatprep.subr.mxu0 0.0
    %2589 = vmatpush2.msra.mxu0 0.0
    %2590 = vmatprep.mubr.f32.mxu0 0.0
    %v2591 = vand.u32 %v2175, 4294901760
    %2592 = vmatmul.mubr.f32.gmra.mxu0 %v2591
    %v2593 = vpop.f32.mrf.mxu0
    %v2594 = vadd.f32 %v2509, %v2593
    %v2595 = vpop.f32.mrf.mxu0
    %2596 = vmatprep.mubr.f32.mxu0 0.0
    %v2597 = vand.u32 %v2178, 4294901760
    %2598 = vmatmul.mubr.f32.gmra.mxu0 %v2597
    %v2599 = vpop.f32.mrf.mxu0
    %v2600 = vadd.f32 %v2517, %v2599
    %v2601 = vpop.f32.mrf.mxu0
    %2602 = vdwg.mxu0
    %2603 = vmatprep.subr.mxu0 0.0
    %2604 = vmatpush1.msra.mxu0 0.0
    %2605 = vmatprep.subr.mxu0 0.0
    %2606 = vmatpush1.msra.mxu0 0.0
    %2607 = vmatprep.subr.mxu0 0.0
    %2608 = vmatpush1.msra.mxu0 0.0
    %2609 = vmatprep.subr.mxu0 0.0
    %2610 = vmatpush1.msra.mxu0 0.0
    %2611 = vmatprep.subr.mxu0 0.0
    %2612 = vmatpush1.msra.mxu0 0.0
    %2613 = vmatprep.subr.mxu0 0.0
    %2614 = vmatpush1.msra.mxu0 0.0
    %2615 = vmatprep.subr.mxu0 0.0
    %2616 = vmatpush1.msra.mxu0 0.0
    %2617 = vmatprep.subr.mxu0 0.0
    %2618 = vmatpush1.msra.mxu0 0.0
    %2619 = vmatprep.subr.mxu0 0.0
    %2620 = vmatpush1.msra.mxu0 0.0
    %2621 = vmatprep.subr.mxu0 0.0
    %2622 = vmatpush1.msra.mxu0 0.0
    %2623 = vmatprep.subr.mxu0 0.0
    %2624 = vmatpush1.msra.mxu0 0.0
    %2625 = vmatprep.subr.mxu0 0.0
    %2626 = vmatpush1.msra.mxu0 0.0
    %2627 = vmatprep.subr.mxu0 0.0
    %2628 = vmatpush1.msra.mxu0 0.0
    %2629 = vmatprep.subr.mxu0 0.0
    %2630 = vmatpush1.msra.mxu0 0.0
    %2631 = vmatprep.subr.mxu0 0.0
    %v2632 = vand.u32 %v1635, 4294901760
    %2633 = vmatpush1.msra.mxu0 %v2632
    %2634 = vmatprep.subr.mxu0 0.0
    %v2635 = vand.u32 %v1629, 4294901760
    %2636 = vmatpush1.msra.mxu0 %v2635
    %2637 = vmatprep.subr.mxu0 0.0
    %2638 = vmatpush2.msra.mxu0 0.0
    %2639 = vmatprep.subr.mxu0 0.0
    %2640 = vmatpush2.msra.mxu0 0.0
    %2641 = vmatprep.subr.mxu0 0.0
    %2642 = vmatpush2.msra.mxu0 0.0
    %2643 = vmatprep.subr.mxu0 0.0
    %2644 = vmatpush2.msra.mxu0 0.0
    %2645 = vmatprep.subr.mxu0 0.0
    %2646 = vmatpush2.msra.mxu0 0.0
    %2647 = vmatprep.subr.mxu0 0.0
    %2648 = vmatpush2.msra.mxu0 0.0
    %2649 = vmatprep.subr.mxu0 0.0
    %2650 = vmatpush2.msra.mxu0 0.0
    %2651 = vmatprep.subr.mxu0 0.0
    %2652 = vmatpush2.msra.mxu0 0.0
    %2653 = vmatprep.subr.mxu0 0.0
    %2654 = vmatpush2.msra.mxu0 0.0
    %2655 = vmatprep.subr.mxu0 0.0
    %2656 = vmatpush2.msra.mxu0 0.0
    %2657 = vmatprep.subr.mxu0 0.0
    %2658 = vmatpush2.msra.mxu0 0.0
    %2659 = vmatprep.subr.mxu0 0.0
    %2660 = vmatpush2.msra.mxu0 0.0
    %2661 = vmatprep.subr.mxu0 0.0
    %2662 = vmatpush2.msra.mxu0 0.0
    %2663 = vmatprep.subr.mxu0 0.0
    %2664 = vmatpush2.msra.mxu0 0.0
    %2665 = vmatprep.subr.mxu0 0.0
    %2666 = vmatpush2.msra.mxu0 0.0
    %2667 = vmatprep.subr.mxu0 0.0
    %2668 = vmatpush2.msra.mxu0 0.0
    %2669 = vmatprep.mubr.f32.mxu0 0.0
    %v2670 = vand.u32 %v2175, 4294901760
    %2671 = vmatmul.mubr.f32.gmra.mxu0 %v2670
    %v2672 = vpop.f32.mrf.mxu0
    %v2673 = vadd.f32 %v2594, %v2672
    %v2674 = vpop.f32.mrf.mxu0
    %2675 = vmatprep.mubr.f32.mxu0 0.0
    %v2676 = vand.u32 %v2178, 4294901760
    %2677 = vmatmul.mubr.f32.gmra.mxu0 %v2676
    %v2678 = vpop.f32.mrf.mxu0
    %v2679 = vadd.f32 %v2600, %v2678
    %v2680 = vpop.f32.mrf.mxu0
    %2681 = vdwg.mxu0
    %2682 = vst.msk [vmem:[#allocation10] sm:$0xff] %vm91, %v2673
    %2683 = vst.msk [vmem:[#allocation10 + $0x8] sm:$0xff] %vm91, %v2679
    // Predicated region
    $region38: #{tpu_custom_call.1} parent=1 // pred_check
      _
    $region39: #{tpu_custom_call.1} parent=1 // pred_check_branch
      %2685 = sbr.rel (0) target = $region41
    $region40: #{tpu_custom_call.1} parent=1 // pred_region
      %s2687 = ssub.s32 256, 256
      %2688 = vsyncadd [#allocation4], %s2687
      %s2689 = sshll.u32 [#allocation10], 4
      %s2690 = int_to_ptr.vmem [resolvable:$true] %s2689
      %2695 = dma.vmem_to_hbm [thread:$0]  %s2690, 256, %s5, [#allocation4], 128, 128, 8
    $region41: #{tpu_custom_call.1} parent=1 // pred_fallthru
      _
    // Predicated region
    $region42: #{tpu_custom_call.1} parent=1 // pred_check
      _
    $region43: #{tpu_custom_call.1} parent=1 // pred_check_branch
      %2697 = sbr.rel (0) target = $region45
    $region44: #{tpu_custom_call.1} parent=1 // pred_region
      %2698 = dma.done [#allocation4], 256
    $region45: #{tpu_custom_call.1} parent=1 // pred_fallthru
      _
    %2699 = vsyncpa [#allocation3], 1
    %2700 = vsyncpa [#allocation6], 1
    %2701 = vsyncpa [#allocation9], 1
    %2702 = vsyncpa [#allocation4], 1

</llo_original>
